<compile_context>
chip_gen: v6e
topology: v6e:2x2x1
jax: 0.10.0
libtpu: 0.0.40
codegen_flags: <defaults>
</compile_context>

<pallas_src>
import functools
import math

import jax
import jax.numpy as jnp
from jax import lax
from jax.experimental import pallas as pl
from jax.experimental.pallas import tpu as pltpu


def _mha_kernel(x_ref, wqkv_ref, wo_ref, out_ref, *, batch, seq_len):
    # x_ref:    (B*L, E)   activations, whole batch in one block
    # wqkv_ref: (H, E, 3E) per-head [Q|K|V] weights, bf16, 1/sqrt(E) folded into Q
    # wo_ref:   (H, E, E)  per-head output-projection weights, bf16
    # out_ref:  (B*L, E)
    B, L = batch, seq_len
    N, E = x_ref.shape                      # N = B*L
    H = wqkv_ref.shape[0]
    HB = H * B

    x = x_ref[...].astype(jnp.bfloat16)                       # (N, E) bf16
    xh = jnp.broadcast_to(x, (H, N, E))                        # (H, N, E)

    # Batched per-head fused QKV projection (leading-batch matmul, bf16 -> f32 acc).
    qkv = jnp.einsum('hne,hef->hnf', xh, wqkv_ref[...],
                     preferred_element_type=jnp.float32)       # (H, N, 3E) f32

    # Lane slices of the fused projection; 1/sqrt(E) already folded into Q weights.
    # (H, B*L, E) -> (H*B, L, E) is a pure major-dim relabeling (row-major order
    # preserved), so it costs nothing; done in f32 so splits land on (8,128) tiles.
    q = qkv[:, :, :E].reshape(HB, L, E).astype(jnp.bfloat16)
    k = qkv[:, :, E:2 * E].reshape(HB, L, E).astype(jnp.bfloat16)
    v = qkv[:, :, 2 * E:].reshape(HB, L, E).astype(jnp.bfloat16)

    # All heads & batch elements in one batched q @ k^T (contract last dims).
    s = jnp.einsum('nle,nme->nlm', q, k,
                   preferred_element_type=jnp.float32)         # (H*B, L, L) f32

    # First softmax: UNMASKED, exactly as in the reference forward().
    m1 = jnp.max(s, axis=-1, keepdims=True)
    e1 = jnp.exp(s - m1)
    p1 = e1 * pl.reciprocal(jnp.sum(e1, axis=-1, keepdims=True), approx=True)

    # Reference: where(tril, p1, -1e9) then softmax.  Softmax is shift-invariant
    # and p1 rows lie in [0, 1], so subtracting the constant 1 (instead of the
    # row max) and zeroing the masked exp terms is mathematically identical
    # (exp(-1e9 - m) underflows to exactly 0 in f32).  NOTE: this rewrite relies
    # on the reference mask value being a huge negative constant.
    row = lax.broadcasted_iota(jnp.int32, (HB, L, L), 1)
    col = lax.broadcasted_iota(jnp.int32, (HB, L, L), 2)
    e2 = jnp.where(col <= row, jnp.exp(p1 - 1.0), 0.0)
    p2 = e2 * pl.reciprocal(jnp.sum(e2, axis=-1, keepdims=True), approx=True)

    # Batched p2 @ v for all heads / batch elements.
    attn = jnp.einsum('nlm,nme->nle', p2.astype(jnp.bfloat16), v,
                      preferred_element_type=jnp.float32)      # (H*B, L, E) f32

    # Output projection: out = sum_h attn_h @ wo_h.  (H*B,L,E)->(H,N,E) is again a
    # free major-dim reshape; the head reduction is a cheap cross-vreg add.
    attn = attn.reshape(H, N, E).astype(jnp.bfloat16)
    proj = jnp.einsum('hne,hef->hnf', attn, wo_ref[...],
                      preferred_element_type=jnp.float32)      # (H, N, E) f32
    out_ref[...] = jnp.sum(proj, axis=0).astype(out_ref.dtype)


def pack_weights(wq_pt, wk_pt, wv_pt, wo_pt, n_head):
    """One-time host-side packing of PyTorch nn.Linear (out, in) weights.

    Returns:
      wqkv3: (H, E, 3E) bf16, per-head [Q|K|V] with 1/sqrt(E) folded into Q.
      wo3:   (H, E, E)  bf16, per-head output projection.
    """
    H = n_head
    E = wq_pt.shape[1]
    scale = float(E) ** -0.5

    def per_head(w_pt):                         # (H*E, E) -> (H, E, E), y_h = x @ w3[h]
        return jnp.transpose(w_pt.reshape(H, E, E), (0, 2, 1))

    wq3 = per_head(wq_pt) * scale               # fold 1/sqrt(E) into Q weights
    wk3 = per_head(wk_pt)
    wv3 = per_head(wv_pt)
    wqkv3 = jnp.concatenate([wq3, wk3, wv3], axis=2).astype(jnp.bfloat16)   # (H, E, 3E)
    wo3 = wo_pt.T.reshape(H, E, E).astype(jnp.bfloat16)                      # (H, E, E)
    return wqkv3, wo3


def causal_mha(x, wqkv3, wo3):
    """x: (B, L, E); wqkv3: (H, E, 3E); wo3: (H, E, E). Returns (B, L, E)."""
    B, L, E = x.shape
    H = wqkv3.shape[0]
    x2d = x.reshape(B * L, E)                   # wrapper-side reshape (free in XLA)

    kernel = functools.partial(_mha_kernel, batch=B, seq_len=L)
    out2d = pl.pallas_call(
        kernel,
        out_shape=jax.ShapeDtypeStruct((B * L, E), x.dtype),
        grid_spec=pltpu.PrefetchScalarGridSpec(
            num_scalar_prefetch=0,
            grid=(1,),                           # single step: fixed-overhead bound here
            in_specs=[
                pl.BlockSpec((B * L, E), lambda i: (0, 0)),       # x, whole batch
                pl.BlockSpec((H, E, 3 * E), lambda i: (0, 0, 0)),  # fused QKV weights
                pl.BlockSpec((H, E, E), lambda i: (0, 0, 0)),      # O weights
            ],
            out_specs=pl.BlockSpec((B * L, E), lambda i: (0, 0)),
        ),
    )(x2d, wqkv3, wo3)
    return out2d.reshape(B, L, E)


def _reference(x, wq_pt, wk_pt, wv_pt, wo_pt, n_head):
    """Pure-JAX f32 reference mirroring the PyTorch forward (incl. double softmax),
    operating directly on the nn.Linear (out, in) weight layout."""
    B, L, E = x.shape
    q = (x @ wq_pt.T).reshape(B, L, n_head, E).transpose(0, 2, 1, 3)
    k = (x @ wk_pt.T).reshape(B, L, n_head, E).transpose(0, 2, 1, 3)
    v = (x @ wv_pt.T).reshape(B, L, n_head, E).transpose(0, 2, 1, 3)
    s = jnp.einsum("bhld,bhmd->bhlm", q, k) * (E ** -0.5)
    p1 = jax.nn.softmax(s, axis=-1)
    mask = jnp.tril(jnp.ones((L, L), bool))[None, None]
    p1 = jnp.where(mask, p1, jnp.float32(-1.0e9))
    p2 = jax.nn.softmax(p1, axis=-1)
    attn = jnp.einsum("bhlm,bhmd->bhld", p2, v)
    attn = attn.transpose(0, 2, 1, 3).reshape(B, L, n_head * E)
    return attn @ wo_pt.T


if __name__ == "__main__":
    # Module config: n_embd = 32, n_head = 4, d_head = n_embd (per the module).
    n_embd, n_head = 32, 4
    B, L = 2, 8
    H, E = n_head, n_embd

    key = jax.random.PRNGKey(0)
    kx, kq, kk, kv, ko = jax.random.split(key, 5)

    x = jax.random.normal(kx, (B, L, E), dtype=jnp.float32)

    # Deterministic init matching nn.Linear default (uniform +/- 1/sqrt(fan_in)),
    # in the PyTorch (out_features, in_features) layout.
    def linear_w(k, out_f, in_f):
        bound = 1.0 / math.sqrt(in_f)
        return jax.random.uniform(k, (out_f, in_f), jnp.float32, -bound, bound)

    wq_pt = linear_w(kq, H * E, E)
    wk_pt = linear_w(kk, H * E, E)
    wv_pt = linear_w(kv, H * E, E)
    wo_pt = linear_w(ko, E, H * E)

    wqkv3, wo3 = pack_weights(wq_pt, wk_pt, wv_pt, wo_pt, H)

    out = causal_mha(x, wqkv3, wo3)
    out = jax.block_until_ready(out)

    ref = _reference(x, wq_pt, wk_pt, wv_pt, wo_pt, H)
    assert out.shape == (B, L, E)
    # Tolerance covers bf16 MXU operands + two EUP approximate reciprocals;
    # structural bugs (wrong mask / head packing) would produce O(0.1) errors.
    assert jnp.allclose(out, ref, atol=2e-2, rtol=2e-2), "mismatch vs reference"

    print("KERNEL_OK")
</pallas_src>

<mosaic_0001>
module attributes {stable_mosaic.version = 11 : i64} {
  func.func @_mha_kernel(%arg0: i32, %arg1: memref<16x32xf32, #tpu.memory_space<vmem>>, %arg2: memref<4x32x96xbf16, #tpu.memory_space<vmem>>, %arg3: memref<4x32x32xbf16, #tpu.memory_space<vmem>>, %arg4: memref<16x32xf32, #tpu.memory_space<vmem>>) attributes {dimension_semantics = [#tpu.dimension_semantics<arbitrary>], iteration_bounds = array<i64: 1>, scalar_prefetch = 0 : i64, scratch_operands = 0 : i64, tpu.core_type = #tpu.core_type<tc>, window_params = [{pipeline_mode = #tpu.pipeline_mode<synchronous>, transform_indices = @transform_0, window_bounds = array<i64: 16, 32>}, {pipeline_mode = #tpu.pipeline_mode<synchronous>, transform_indices = @transform_1, window_bounds = array<i64: 4, 32, 96>}, {pipeline_mode = #tpu.pipeline_mode<synchronous>, transform_indices = @transform_2, window_bounds = array<i64: 4, 32, 32>}, {pipeline_mode = #tpu.pipeline_mode<synchronous>, transform_indices = @transform_3, window_bounds = array<i64: 16, 32>}]} {
    %c0 = arith.constant 0 : index
    %c0_0 = arith.constant 0 : index
    %0 = vector.load %arg1[%c0, %c0_0] : memref<16x32xf32, #tpu.memory_space<vmem>>, vector<16x32xf32>
    %1 = arith.truncf %0 : vector<16x32xf32> to vector<16x32xbf16>
    %2 = vector.shape_cast %1 : vector<16x32xbf16> to vector<1x16x32xbf16>
    %3 = vector.broadcast %2 : vector<1x16x32xbf16> to vector<4x16x32xbf16>
    %c0_1 = arith.constant 0 : index
    %c0_2 = arith.constant 0 : index
    %c0_3 = arith.constant 0 : index
    %4 = vector.load %arg2[%c0_1, %c0_2, %c0_3] : memref<4x32x96xbf16, #tpu.memory_space<vmem>>, vector<4x32x96xbf16>
    "tpu.trace_start"() <{level = 10 : i32, message = "hne,hef->hnf"}> : () -> ()
    %cst = arith.constant dense<0.000000e+00> : vector<4x16x96xf32>
    %5 = tpu.matmul %3, %4, %cst {dimension_numbers = #tpu.dot_dimension_numbers<[2], [1], [1], [2], [0, 0, 0, 1, 1, 2], [0], [0]>} : vector<4x16x32xbf16>, vector<4x32x96xbf16>, vector<4x16x96xf32> -> vector<4x16x96xf32>
    "tpu.trace_stop"() : () -> ()
    %6 = vector.extract_strided_slice %5 {offsets = [0, 0, 0], sizes = [4, 16, 32], strides = [1, 1, 1]} : vector<4x16x96xf32> to vector<4x16x32xf32>
    %7 = vector.shape_cast %6 : vector<4x16x32xf32> to vector<8x8x32xf32>
    %8 = arith.truncf %7 : vector<8x8x32xf32> to vector<8x8x32xbf16>
    %9 = vector.extract_strided_slice %5 {offsets = [0, 0, 32], sizes = [4, 16, 32], strides = [1, 1, 1]} : vector<4x16x96xf32> to vector<4x16x32xf32>
    %10 = vector.shape_cast %9 : vector<4x16x32xf32> to vector<8x8x32xf32>
    %11 = arith.truncf %10 : vector<8x8x32xf32> to vector<8x8x32xbf16>
    %12 = vector.extract_strided_slice %5 {offsets = [0, 0, 64], sizes = [4, 16, 32], strides = [1, 1, 1]} : vector<4x16x96xf32> to vector<4x16x32xf32>
    %13 = vector.shape_cast %12 : vector<4x16x32xf32> to vector<8x8x32xf32>
    %14 = arith.truncf %13 : vector<8x8x32xf32> to vector<8x8x32xbf16>
    "tpu.trace_start"() <{level = 10 : i32, message = "nle,nme->nlm"}> : () -> ()
    %cst_4 = arith.constant dense<0.000000e+00> : vector<8x8x8xf32>
    %15 = tpu.matmul %8, %11, %cst_4 {dimension_numbers = #tpu.dot_dimension_numbers<[2], [2], [1], [1], [0, 0, 0, 1, 1, 1], [0], [0]>} : vector<8x8x32xbf16>, vector<8x8x32xbf16>, vector<8x8x8xf32> -> vector<8x8x8xf32>
    "tpu.trace_stop"() : () -> ()
    %cst_5 = arith.constant dense<0xFF800000> : vector<8x8xf32>
    %16 = vector.multi_reduction <maximumf>, %15, %cst_5 [2] : vector<8x8x8xf32> to vector<8x8xf32>
    %17 = vector.shape_cast %16 : vector<8x8xf32> to vector<8x8x1xf32>
    %18 = vector.broadcast %17 : vector<8x8x1xf32> to vector<8x8x8xf32>
    %19 = arith.subf %15, %18 : vector<8x8x8xf32>
    %20 = math.exp %19 : vector<8x8x8xf32>
    %cst_6 = arith.constant dense<0.000000e+00> : vector<8x8xf32>
    %21 = vector.multi_reduction <add>, %20, %cst_6 [2] : vector<8x8x8xf32> to vector<8x8xf32>
    %22 = vector.shape_cast %21 : vector<8x8xf32> to vector<8x8x1xf32>
    %23 = tpu.reciprocal %22 {approx = true} : vector<8x8x1xf32> -> vector<8x8x1xf32>
    %24 = vector.broadcast %23 : vector<8x8x1xf32> to vector<8x8x8xf32>
    %25 = arith.mulf %20, %24 : vector<8x8x8xf32>
    %26 = tpu.iota {dimensions = array<i32: 1>} : vector<8x8x8xi32>
    %27 = tpu.iota {dimensions = array<i32: 2>} : vector<8x8x8xi32>
    %28 = arith.cmpi sle, %27, %26 : vector<8x8x8xi32>
    %cst_7 = arith.constant 1.000000e+00 : f32
    %29 = vector.broadcast %cst_7 : f32 to vector<8x8x8xf32>
    %30 = arith.subf %25, %29 : vector<8x8x8xf32>
    %31 = math.exp %30 : vector<8x8x8xf32>
    %cst_8 = arith.constant 0.000000e+00 : f32
    %32 = vector.broadcast %cst_8 : f32 to vector<8x8x8xf32>
    %33 = arith.select %28, %31, %32 : vector<8x8x8xi1>, vector<8x8x8xf32>
    %cst_9 = arith.constant dense<0.000000e+00> : vector<8x8xf32>
    %34 = vector.multi_reduction <add>, %33, %cst_9 [2] : vector<8x8x8xf32> to vector<8x8xf32>
    %35 = vector.shape_cast %34 : vector<8x8xf32> to vector<8x8x1xf32>
    %36 = tpu.reciprocal %35 {approx = true} : vector<8x8x1xf32> -> vector<8x8x1xf32>
    %37 = vector.broadcast %36 : vector<8x8x1xf32> to vector<8x8x8xf32>
    %38 = arith.mulf %33, %37 : vector<8x8x8xf32>
    %39 = arith.truncf %38 : vector<8x8x8xf32> to vector<8x8x8xbf16>
    "tpu.trace_start"() <{level = 10 : i32, message = "nlm,nme->nle"}> : () -> ()
    %cst_10 = arith.constant dense<0.000000e+00> : vector<8x8x32xf32>
    %40 = tpu.matmul %39, %14, %cst_10 {dimension_numbers = #tpu.dot_dimension_numbers<[2], [1], [1], [2], [0, 0, 0, 1, 1, 2], [0], [0]>} : vector<8x8x8xbf16>, vector<8x8x32xbf16>, vector<8x8x32xf32> -> vector<8x8x32xf32>
    "tpu.trace_stop"() : () -> ()
    %41 = vector.shape_cast %40 : vector<8x8x32xf32> to vector<4x16x32xf32>
    %42 = arith.truncf %41 : vector<4x16x32xf32> to vector<4x16x32xbf16>
    %c0_11 = arith.constant 0 : index
    %c0_12 = arith.constant 0 : index
    %c0_13 = arith.constant 0 : index
    %43 = vector.load %arg3[%c0_11, %c0_12, %c0_13] : memref<4x32x32xbf16, #tpu.memory_space<vmem>>, vector<4x32x32xbf16>
    "tpu.trace_start"() <{level = 10 : i32, message = "hne,hef->hnf"}> : () -> ()
    %cst_14 = arith.constant dense<0.000000e+00> : vector<4x16x32xf32>
    %44 = tpu.matmul %42, %43, %cst_14 {dimension_numbers = #tpu.dot_dimension_numbers<[2], [1], [1], [2], [0, 0, 0, 1, 1, 2], [0], [0]>} : vector<4x16x32xbf16>, vector<4x32x32xbf16>, vector<4x16x32xf32> -> vector<4x16x32xf32>
    "tpu.trace_stop"() : () -> ()
    %cst_15 = arith.constant dense<0.000000e+00> : vector<16x32xf32>
    %45 = vector.multi_reduction <add>, %44, %cst_15 [0] : vector<4x16x32xf32> to vector<16x32xf32>
    %c0_16 = arith.constant 0 : index
    %c0_17 = arith.constant 0 : index
    %46 = vector.load %arg4[%c0_16, %c0_17] : memref<16x32xf32, #tpu.memory_space<vmem>>, vector<16x32xf32>
    tpu.vector_store %arg4[%c0_16, %c0_17], %45 {strides = array<i32>} : memref<16x32xf32, #tpu.memory_space<vmem>>, vector<16x32xf32>,
    return
  }
  func.func @transform_0(%arg0: i32) -> (i32, i32) {
    %c0_i32 = arith.constant 0 : i32
    %c0_i32_0 = arith.constant 0 : i32
    %c0_i32_1 = arith.constant 0 : i32
    return %c0_i32, %c0_i32_0 : i32, i32
  }
  func.func @transform_1(%arg0: i32) -> (i32, i32, i32) {
    %c0_i32 = arith.constant 0 : i32
    %c0_i32_0 = arith.constant 0 : i32
    %c0_i32_1 = arith.constant 0 : i32
    %c0_i32_2 = arith.constant 0 : i32
    return %c0_i32, %c0_i32_0, %c0_i32_1 : i32, i32, i32
  }
  func.func @transform_2(%arg0: i32) -> (i32, i32, i32) {
    %c0_i32 = arith.constant 0 : i32
    %c0_i32_0 = arith.constant 0 : i32
    %c0_i32_1 = arith.constant 0 : i32
    %c0_i32_2 = arith.constant 0 : i32
    return %c0_i32, %c0_i32_0, %c0_i32_1 : i32, i32, i32
  }
  func.func @transform_3(%arg0: i32) -> (i32, i32) {
    %c0_i32 = arith.constant 0 : i32
    %c0_i32_0 = arith.constant 0 : i32
    %c0_i32_1 = arith.constant 0 : i32
    return %c0_i32, %c0_i32_0 : i32, i32
  }
}

</mosaic_0001>

<llo_original>
// kernel: tpu_custom_call.1
$region0: #{tpu_custom_call.1}
  #allocation0 [shape = 'u32[]', space=smem, size = 0x4, offset = 0x4, fixed_abs, tag = 'smem constant byte address 0x4 - core index']
  #allocation1 [shape = 'u32[144,128]{1,0:T(1,128)}', space=vmem, size = 0x12000, scoped, tag = 'internal scratch']
  %s0 = inlined_call_operand.hbm [shape: f32[16,32], index: 0, kind: input, shape index: {}]
  %s1 = inlined_call_operand.hbm [shape: bf16[4,32,96], index: 1, kind: input, shape index: {}]
  %s2 = inlined_call_operand.hbm [shape: bf16[4,32,32], index: 2, kind: input, shape index: {}]
  %s3 = inlined_call_operand.hbm [shape: f32[16,32], index: 3, kind: output, shape index: {}]
  %s4 = sld [smem:[#allocation0]]
  $region34: #{tpu_custom_call.1} parent=0
    _
  %s6 = ssub.s32 1, %s4
  %s7 = scalar_select 0, %s6, %s4
  $region1: #{tpu_custom_call.1} parent=0
    #allocation2 [shape = 'u8[8192]{0}', space=vmem, size = 0x2000, scoped, tag = 'input window, operand 0, single buffered']
    #allocation3 [shape = 's32[1]{0}', space=sflag, size = 0x4, scoped, tag = 'scoped memory for tpu_custom_call.1']
    #allocation4 [shape = 's32[1]{0}', space=sflag, size = 0x4, scoped, tag = 'scoped memory for tpu_custom_call.1']
    #allocation5 [shape = 'u8[32768]{0}', space=vmem, size = 0x8000, scoped, tag = 'input window, operand 1, single buffered']
    #allocation6 [shape = 's32[1]{0}', space=sflag, size = 0x4, scoped, tag = 'scoped memory for tpu_custom_call.1']
    #allocation7 [shape = 'u8[32768]{0}', space=vmem, size = 0x8000, scoped, tag = 'input window, operand 2, single buffered']
    #allocation8 [shape = 'u8[8192]{0}', space=vmem, size = 0x2000, scoped, tag = 'output window, operand 0, single buffered']
    %8 = vsyncpa [#allocation3], 0
    %9 = vsyncpa [#allocation6], 0
    %10 = vsyncpa [#allocation4], 0
    // Predicated region
    $region2: #{tpu_custom_call.1} parent=1 // pred_check
      _
    $region3: #{tpu_custom_call.1} parent=1 // pred_check_branch
      %12 = sbr.rel (0) target = $region5
    $region4: #{tpu_custom_call.1} parent=1 // pred_region
      %s14 = ssub.s32 256, 256
      %15 = vsyncadd [#allocation3], %s14
      %s16 = sshll.u32 [#allocation2], 4
      %s17 = int_to_ptr.vmem [resolvable:$true] %s16
      %22 = dma.hbm_to_vmem [thread:$0]  %s0, 256, %s17, [#allocation3], 128, 128, 8
    $region5: #{tpu_custom_call.1} parent=1 // pred_fallthru
      _
    // Predicated region
    $region6: #{tpu_custom_call.1} parent=1 // pred_check
      _
    $region7: #{tpu_custom_call.1} parent=1 // pred_check_branch
      %24 = sbr.rel (0) target = $region9
    $region8: #{tpu_custom_call.1} parent=1 // pred_region
      %s26 = ssub.s32 1024, 1024
      %27 = vsyncadd [#allocation6], %s26
      %s28 = sshll.u32 [#allocation5], 4
      %s29 = int_to_ptr.vmem [resolvable:$true] %s28
      %34 = dma.hbm_to_vmem [thread:$0]  %s1, 1024, %s29, [#allocation6], 64, 64, 4
    $region9: #{tpu_custom_call.1} parent=1 // pred_fallthru
      _
    // Predicated region
    $region10: #{tpu_custom_call.1} parent=1 // pred_check
      _
    $region11: #{tpu_custom_call.1} parent=1 // pred_check_branch
      %36 = sbr.rel (0) target = $region13
    $region12: #{tpu_custom_call.1} parent=1 // pred_region
      %s38 = ssub.s32 1024, 1024
      %39 = vsyncadd [#allocation6], %s38
      %s40 = sshll.u32 [#allocation7], 4
      %s41 = int_to_ptr.vmem [resolvable:$true] %s40
      %46 = dma.hbm_to_vmem [thread:$0]  %s2, 1024, %s41, [#allocation6], 64, 64, 4
    $region13: #{tpu_custom_call.1} parent=1 // pred_fallthru
      _
    // Predicated region
    $region14: #{tpu_custom_call.1} parent=1 // pred_check
      _
    $region15: #{tpu_custom_call.1} parent=1 // pred_check_branch
      %48 = sbr.rel (0) target = $region17
    $region16: #{tpu_custom_call.1} parent=1 // pred_region
      %49 = dma.done [#allocation3], 256
    $region17: #{tpu_custom_call.1} parent=1 // pred_fallthru
      _
    // Predicated region
    $region18: #{tpu_custom_call.1} parent=1 // pred_check
      _
    $region19: #{tpu_custom_call.1} parent=1 // pred_check_branch
      %51 = sbr.rel (0) target = $region21
    $region20: #{tpu_custom_call.1} parent=1 // pred_region
      %52 = dma.done [#allocation6], 1024
    $region21: #{tpu_custom_call.1} parent=1 // pred_fallthru
      _
    // Predicated region
    $region22: #{tpu_custom_call.1} parent=1 // pred_check
      _
    $region23: #{tpu_custom_call.1} parent=1 // pred_check_branch
      %54 = sbr.rel (0) target = $region25
    $region24: #{tpu_custom_call.1} parent=1 // pred_region
      %55 = dma.done [#allocation6], 1024
    $region25: #{tpu_custom_call.1} parent=1 // pred_fallthru
      _
    %v57 = vld [vmem:[#allocation2] sm:$0xff]
    %v58 = vld [vmem:[#allocation2 + $0x8] sm:$0xff]
    %v59 = vpack.c.bf16 %v58, %v57
    %v60 = vld [vmem:[#allocation5] sm:$0xf]
    %v61 = vld [vmem:[#allocation5 + $0x4] sm:$0xf]
    %v62 = vld [vmem:[#allocation5 + $0x8] sm:$0xf]
    %v63 = vld [vmem:[#allocation5 + $0xc] sm:$0xf]
    %v64 = vld [vmem:[#allocation5 + $0x10] sm:$0xf]
    %v65 = vld [vmem:[#allocation5 + $0x14] sm:$0xf]
    %v66 = vld [vmem:[#allocation5 + $0x18] sm:$0xf]
    %v67 = vld [vmem:[#allocation5 + $0x1c] sm:$0xf]
    %v68 = vld [vmem:[#allocation5 + $0x20] sm:$0xf]
    %v69 = vld [vmem:[#allocation5 + $0x24] sm:$0xf]
    %v70 = vld [vmem:[#allocation5 + $0x28] sm:$0xf]
    %v71 = vld [vmem:[#allocation5 + $0x2c] sm:$0xf]
    %v72 = vld [vmem:[#allocation5 + $0x30] sm:$0xf]
    %v73 = vld [vmem:[#allocation5 + $0x34] sm:$0xf]
    %v74 = vld [vmem:[#allocation5 + $0x38] sm:$0xf]
    %v75 = vld [vmem:[#allocation5 + $0x3c] sm:$0xf]
    %v80 = vunpack.c.l.b16 %v60
    %v81 = vunpack.c.l.b16 %v61
    %v82 = vunpack.c.l.b16 %v62
    %v83 = vunpack.c.l.b16 %v63
    %v84 = vpack.c.b16 %v81, %v80
    %v85 = vpack.c.b16 %v83, %v82
    %vm88 = vcmask 261120
    %v90 = vsel %vm88, %v59, 0
    %92 = vmatprep.subr.bf16.mxu0 0
    %93 = vmatpush1.bf16.msra.mxu0 0
    %94 = vmatprep.subr.bf16.mxu0 0
    %95 = vmatpush1.bf16.msra.mxu0 0
    %96 = vmatprep.subr.bf16.mxu0 0
    %97 = vmatpush1.bf16.msra.mxu0 0
    %98 = vmatprep.subr.bf16.mxu0 0
    %99 = vmatpush1.bf16.msra.mxu0 0
    %100 = vmatprep.subr.bf16.mxu0 0
    %101 = vmatpush1.bf16.msra.mxu0 0
    %102 = vmatprep.subr.bf16.mxu0 0
    %103 = vmatpush1.bf16.msra.mxu0 0
    %104 = vmatprep.subr.bf16.mxu0 0
    %105 = vmatpush1.bf16.msra.mxu0 %v85
    %106 = vmatprep.subr.bf16.mxu0 0
    %107 = vmatpush1.bf16.msra.mxu0 %v84
    %108 = vmatprep.subr.bf16.mxu0 0
    %109 = vmatpush2.bf16.msra.mxu0 0
    %110 = vmatprep.subr.bf16.mxu0 0
    %111 = vmatpush2.bf16.msra.mxu0 0
    %112 = vmatprep.subr.bf16.mxu0 0
    %113 = vmatpush2.bf16.msra.mxu0 0
    %114 = vmatprep.subr.bf16.mxu0 0
    %115 = vmatpush2.bf16.msra.mxu0 0
    %116 = vmatprep.subr.bf16.mxu0 0
    %117 = vmatpush2.bf16.msra.mxu0 0
    %118 = vmatprep.subr.bf16.mxu0 0
    %119 = vmatpush2.bf16.msra.mxu0 0
    %120 = vmatprep.subr.bf16.mxu0 0
    %121 = vmatpush2.bf16.msra.mxu0 0
    %122 = vmatprep.subr.bf16.mxu0 0
    %123 = vmatpush2.bf16.msra.mxu0 0
    %124 = vmatprep.mubr.bf16.mxu0 0
    %125 = vmatmul.mubr.bf16.gmra.mxu0 %v90
    %v126 = vpop.f32.mrf.mxu0
    %v127 = vadd.f32 0.0, %v126
    %v128 = vpop.f32.mrf.mxu0
    %v129 = vpop.f32.mrf.mxu0
    %v130 = vadd.f32 0.0, %v129
    %v131 = vpop.f32.mrf.mxu0
    %132 = vdwg.mxu0
    %v137 = vunpack.c.l.b16 %v64
    %v138 = vunpack.c.l.b16 %v65
    %v139 = vunpack.c.l.b16 %v66
    %v140 = vunpack.c.l.b16 %v67
    %v141 = vpack.c.b16 %v138, %v137
    %v142 = vpack.c.b16 %v140, %v139
    %145 = vmatprep.subr.bf16.mxu0 0
    %146 = vmatpush1.bf16.msra.mxu0 0
    %147 = vmatprep.subr.bf16.mxu0 0
    %148 = vmatpush1.bf16.msra.mxu0 0
    %149 = vmatprep.subr.bf16.mxu0 0
    %150 = vmatpush1.bf16.msra.mxu0 0
    %151 = vmatprep.subr.bf16.mxu0 0
    %152 = vmatpush1.bf16.msra.mxu0 0
    %153 = vmatprep.subr.bf16.mxu0 0
    %154 = vmatpush1.bf16.msra.mxu0 0
    %155 = vmatprep.subr.bf16.mxu0 0
    %156 = vmatpush1.bf16.msra.mxu0 0
    %157 = vmatprep.subr.bf16.mxu0 0
    %158 = vmatpush1.bf16.msra.mxu0 %v142
    %159 = vmatprep.subr.bf16.mxu0 0
    %160 = vmatpush1.bf16.msra.mxu0 %v141
    %161 = vmatprep.subr.bf16.mxu0 0
    %162 = vmatpush2.bf16.msra.mxu0 0
    %163 = vmatprep.subr.bf16.mxu0 0
    %164 = vmatpush2.bf16.msra.mxu0 0
    %165 = vmatprep.subr.bf16.mxu0 0
    %166 = vmatpush2.bf16.msra.mxu0 0
    %167 = vmatprep.subr.bf16.mxu0 0
    %168 = vmatpush2.bf16.msra.mxu0 0
    %169 = vmatprep.subr.bf16.mxu0 0
    %170 = vmatpush2.bf16.msra.mxu0 0
    %171 = vmatprep.subr.bf16.mxu0 0
    %172 = vmatpush2.bf16.msra.mxu0 0
    %173 = vmatprep.subr.bf16.mxu0 0
    %174 = vmatpush2.bf16.msra.mxu0 0
    %175 = vmatprep.subr.bf16.mxu0 0
    %176 = vmatpush2.bf16.msra.mxu0 0
    %177 = vmatprep.mubr.bf16.mxu0 0
    %178 = vmatmul.mubr.bf16.gmra.mxu0 %v90
    %v179 = vpop.f32.mrf.mxu0
    %v180 = vadd.f32 0.0, %v179
    %v181 = vpop.f32.mrf.mxu0
    %v182 = vpop.f32.mrf.mxu0
    %v183 = vadd.f32 0.0, %v182
    %v184 = vpop.f32.mrf.mxu0
    %185 = vdwg.mxu0
    %v190 = vunpack.c.l.b16 %v68
    %v191 = vunpack.c.l.b16 %v69
    %v192 = vunpack.c.l.b16 %v70
    %v193 = vunpack.c.l.b16 %v71
    %v194 = vpack.c.b16 %v191, %v190
    %v195 = vpack.c.b16 %v193, %v192
    %198 = vmatprep.subr.bf16.mxu0 0
    %199 = vmatpush1.bf16.msra.mxu0 0
    %200 = vmatprep.subr.bf16.mxu0 0
    %201 = vmatpush1.bf16.msra.mxu0 0
    %202 = vmatprep.subr.bf16.mxu0 0
    %203 = vmatpush1.bf16.msra.mxu0 0
    %204 = vmatprep.subr.bf16.mxu0 0
    %205 = vmatpush1.bf16.msra.mxu0 0
    %206 = vmatprep.subr.bf16.mxu0 0
    %207 = vmatpush1.bf16.msra.mxu0 0
    %208 = vmatprep.subr.bf16.mxu0 0
    %209 = vmatpush1.bf16.msra.mxu0 0
    %210 = vmatprep.subr.bf16.mxu0 0
    %211 = vmatpush1.bf16.msra.mxu0 %v195
    %212 = vmatprep.subr.bf16.mxu0 0
    %213 = vmatpush1.bf16.msra.mxu0 %v194
    %214 = vmatprep.subr.bf16.mxu0 0
    %215 = vmatpush2.bf16.msra.mxu0 0
    %216 = vmatprep.subr.bf16.mxu0 0
    %217 = vmatpush2.bf16.msra.mxu0 0
    %218 = vmatprep.subr.bf16.mxu0 0
    %219 = vmatpush2.bf16.msra.mxu0 0
    %220 = vmatprep.subr.bf16.mxu0 0
    %221 = vmatpush2.bf16.msra.mxu0 0
    %222 = vmatprep.subr.bf16.mxu0 0
    %223 = vmatpush2.bf16.msra.mxu0 0
    %224 = vmatprep.subr.bf16.mxu0 0
    %225 = vmatpush2.bf16.msra.mxu0 0
    %226 = vmatprep.subr.bf16.mxu0 0
    %227 = vmatpush2.bf16.msra.mxu0 0
    %228 = vmatprep.subr.bf16.mxu0 0
    %229 = vmatpush2.bf16.msra.mxu0 0
    %230 = vmatprep.mubr.bf16.mxu0 0
    %231 = vmatmul.mubr.bf16.gmra.mxu0 %v90
    %v232 = vpop.f32.mrf.mxu0
    %v233 = vadd.f32 0.0, %v232
    %v234 = vpop.f32.mrf.mxu0
    %v235 = vpop.f32.mrf.mxu0
    %v236 = vadd.f32 0.0, %v235
    %v237 = vpop.f32.mrf.mxu0
    %238 = vdwg.mxu0
    %v243 = vunpack.c.l.b16 %v72
    %v244 = vunpack.c.l.b16 %v73
    %v245 = vunpack.c.l.b16 %v74
    %v246 = vunpack.c.l.b16 %v75
    %v247 = vpack.c.b16 %v244, %v243
    %v248 = vpack.c.b16 %v246, %v245
    %251 = vmatprep.subr.bf16.mxu0 0
    %252 = vmatpush1.bf16.msra.mxu0 0
    %253 = vmatprep.subr.bf16.mxu0 0
    %254 = vmatpush1.bf16.msra.mxu0 0
    %255 = vmatprep.subr.bf16.mxu0 0
    %256 = vmatpush1.bf16.msra.mxu0 0
    %257 = vmatprep.subr.bf16.mxu0 0
    %258 = vmatpush1.bf16.msra.mxu0 0
    %259 = vmatprep.subr.bf16.mxu0 0
    %260 = vmatpush1.bf16.msra.mxu0 0
    %261 = vmatprep.subr.bf16.mxu0 0
    %262 = vmatpush1.bf16.msra.mxu0 0
    %263 = vmatprep.subr.bf16.mxu0 0
    %264 = vmatpush1.bf16.msra.mxu0 %v248
    %265 = vmatprep.subr.bf16.mxu0 0
    %266 = vmatpush1.bf16.msra.mxu0 %v247
    %267 = vmatprep.subr.bf16.mxu0 0
    %268 = vmatpush2.bf16.msra.mxu0 0
    %269 = vmatprep.subr.bf16.mxu0 0
    %270 = vmatpush2.bf16.msra.mxu0 0
    %271 = vmatprep.subr.bf16.mxu0 0
    %272 = vmatpush2.bf16.msra.mxu0 0
    %273 = vmatprep.subr.bf16.mxu0 0
    %274 = vmatpush2.bf16.msra.mxu0 0
    %275 = vmatprep.subr.bf16.mxu0 0
    %276 = vmatpush2.bf16.msra.mxu0 0
    %277 = vmatprep.subr.bf16.mxu0 0
    %278 = vmatpush2.bf16.msra.mxu0 0
    %279 = vmatprep.subr.bf16.mxu0 0
    %280 = vmatpush2.bf16.msra.mxu0 0
    %281 = vmatprep.subr.bf16.mxu0 0
    %282 = vmatpush2.bf16.msra.mxu0 0
    %283 = vmatprep.mubr.bf16.mxu0 0
    %284 = vmatmul.mubr.bf16.gmra.mxu0 %v90
    %v285 = vpop.f32.mrf.mxu0
    %v286 = vadd.f32 0.0, %v285
    %v287 = vpop.f32.mrf.mxu0
    %v288 = vpop.f32.mrf.mxu0
    %v289 = vadd.f32 0.0, %v288
    %v290 = vpop.f32.mrf.mxu0
    %291 = vdwg.mxu0
    %v292 = vpack.c.bf16 %v127, %v127
    %v293 = vpack.c.bf16 %v130, %v130
    %v294 = vpack.c.bf16 %v180, %v180
    %v295 = vpack.c.bf16 %v183, %v183
    %v296 = vpack.c.bf16 %v233, %v233
    %v297 = vpack.c.bf16 %v236, %v236
    %v298 = vpack.c.bf16 %v286, %v286
    %v299 = vpack.c.bf16 %v289, %v289
    %301 = vrot.lane.b32.xlu0 %v292, 96
    %v302 = vpop.permute.xlu0 %301
    %v304 = vsel %vm88, %v292, 0
    %v307 = vsel %vm88, %v302, 0
    %309 = vmatprep.subr.bf16.mxu0 0
    %310 = vmatpush1.bf16.xpose.msra.mxu0 0
    %311 = vmatprep.subr.bf16.mxu0 0
    %312 = vmatpush1.bf16.xpose.msra.mxu0 0
    %313 = vmatprep.subr.bf16.mxu0 0
    %314 = vmatpush1.bf16.xpose.msra.mxu0 0
    %315 = vmatprep.subr.bf16.mxu0 0
    %316 = vmatpush1.bf16.xpose.msra.mxu0 0
    %317 = vmatprep.subr.bf16.mxu0 0
    %318 = vmatpush1.bf16.xpose.msra.mxu0 0
    %319 = vmatprep.subr.bf16.mxu0 0
    %320 = vmatpush1.bf16.xpose.msra.mxu0 0
    %321 = vmatprep.subr.bf16.mxu0 0
    %322 = vmatpush1.bf16.xpose.msra.mxu0 0
    %323 = vmatprep.subr.bf16.mxu0 0
    %324 = vmatpush1.bf16.xpose.msra.mxu0 %v307
    %325 = vmatprep.subr.bf16.mxu0 0
    %326 = vmatpush2.bf16.xpose.msra.mxu0 0
    %327 = vmatprep.subr.bf16.mxu0 0
    %328 = vmatpush2.bf16.xpose.msra.mxu0 0
    %329 = vmatprep.subr.bf16.mxu0 0
    %330 = vmatpush2.bf16.xpose.msra.mxu0 0
    %331 = vmatprep.subr.bf16.mxu0 0
    %332 = vmatpush2.bf16.xpose.msra.mxu0 0
    %333 = vmatprep.subr.bf16.mxu0 0
    %334 = vmatpush2.bf16.xpose.msra.mxu0 0
    %335 = vmatprep.subr.bf16.mxu0 0
    %336 = vmatpush2.bf16.xpose.msra.mxu0 0
    %337 = vmatprep.subr.bf16.mxu0 0
    %338 = vmatpush2.bf16.xpose.msra.mxu0 0
    %339 = vmatprep.subr.bf16.mxu0 0
    %340 = vmatpush2.bf16.xpose.msra.mxu0 0
    %341 = vmatprep.mubr.bf16.mxu0 0
    %342 = vmatmul.mubr.bf16.gmra.mxu0 %v304
    %v343 = vpop.f32.mrf.mxu0
    %v344 = vadd.f32 0.0, %v343
    %v345 = vpop.f32.mrf.mxu0
    %v346 = vpop.f32.mrf.mxu0
    %v347 = vpop.f32.mrf.mxu0
    %348 = vdwg.mxu0
    %350 = vrot.lane.b32.xlu0 %v293, 96
    %v351 = vpop.permute.xlu0 %350
    %v353 = vsel %vm88, %v293, 0
    %v356 = vsel %vm88, %v351, 0
    %358 = vmatprep.subr.bf16.mxu0 0
    %359 = vmatpush1.bf16.xpose.msra.mxu0 0
    %360 = vmatprep.subr.bf16.mxu0 0
    %361 = vmatpush1.bf16.xpose.msra.mxu0 0
    %362 = vmatprep.subr.bf16.mxu0 0
    %363 = vmatpush1.bf16.xpose.msra.mxu0 0
    %364 = vmatprep.subr.bf16.mxu0 0
    %365 = vmatpush1.bf16.xpose.msra.mxu0 0
    %366 = vmatprep.subr.bf16.mxu0 0
    %367 = vmatpush1.bf16.xpose.msra.mxu0 0
    %368 = vmatprep.subr.bf16.mxu0 0
    %369 = vmatpush1.bf16.xpose.msra.mxu0 0
    %370 = vmatprep.subr.bf16.mxu0 0
    %371 = vmatpush1.bf16.xpose.msra.mxu0 0
    %372 = vmatprep.subr.bf16.mxu0 0
    %373 = vmatpush1.bf16.xpose.msra.mxu0 %v356
    %374 = vmatprep.subr.bf16.mxu0 0
    %375 = vmatpush2.bf16.xpose.msra.mxu0 0
    %376 = vmatprep.subr.bf16.mxu0 0
    %377 = vmatpush2.bf16.xpose.msra.mxu0 0
    %378 = vmatprep.subr.bf16.mxu0 0
    %379 = vmatpush2.bf16.xpose.msra.mxu0 0
    %380 = vmatprep.subr.bf16.mxu0 0
    %381 = vmatpush2.bf16.xpose.msra.mxu0 0
    %382 = vmatprep.subr.bf16.mxu0 0
    %383 = vmatpush2.bf16.xpose.msra.mxu0 0
    %384 = vmatprep.subr.bf16.mxu0 0
    %385 = vmatpush2.bf16.xpose.msra.mxu0 0
    %386 = vmatprep.subr.bf16.mxu0 0
    %387 = vmatpush2.bf16.xpose.msra.mxu0 0
    %388 = vmatprep.subr.bf16.mxu0 0
    %389 = vmatpush2.bf16.xpose.msra.mxu0 0
    %390 = vmatprep.mubr.bf16.mxu0 0
    %391 = vmatmul.mubr.bf16.gmra.mxu0 %v353
    %v392 = vpop.f32.mrf.mxu0
    %v393 = vadd.f32 0.0, %v392
    %v394 = vpop.f32.mrf.mxu0
    %v395 = vpop.f32.mrf.mxu0
    %v396 = vpop.f32.mrf.mxu0
    %397 = vdwg.mxu0
    %399 = vrot.lane.b32.xlu0 %v294, 96
    %v400 = vpop.permute.xlu0 %399
    %v402 = vsel %vm88, %v294, 0
    %v405 = vsel %vm88, %v400, 0
    %407 = vmatprep.subr.bf16.mxu0 0
    %408 = vmatpush1.bf16.xpose.msra.mxu0 0
    %409 = vmatprep.subr.bf16.mxu0 0
    %410 = vmatpush1.bf16.xpose.msra.mxu0 0
    %411 = vmatprep.subr.bf16.mxu0 0
    %412 = vmatpush1.bf16.xpose.msra.mxu0 0
    %413 = vmatprep.subr.bf16.mxu0 0
    %414 = vmatpush1.bf16.xpose.msra.mxu0 0
    %415 = vmatprep.subr.bf16.mxu0 0
    %416 = vmatpush1.bf16.xpose.msra.mxu0 0
    %417 = vmatprep.subr.bf16.mxu0 0
    %418 = vmatpush1.bf16.xpose.msra.mxu0 0
    %419 = vmatprep.subr.bf16.mxu0 0
    %420 = vmatpush1.bf16.xpose.msra.mxu0 0
    %421 = vmatprep.subr.bf16.mxu0 0
    %422 = vmatpush1.bf16.xpose.msra.mxu0 %v405
    %423 = vmatprep.subr.bf16.mxu0 0
    %424 = vmatpush2.bf16.xpose.msra.mxu0 0
    %425 = vmatprep.subr.bf16.mxu0 0
    %426 = vmatpush2.bf16.xpose.msra.mxu0 0
    %427 = vmatprep.subr.bf16.mxu0 0
    %428 = vmatpush2.bf16.xpose.msra.mxu0 0
    %429 = vmatprep.subr.bf16.mxu0 0
    %430 = vmatpush2.bf16.xpose.msra.mxu0 0
    %431 = vmatprep.subr.bf16.mxu0 0
    %432 = vmatpush2.bf16.xpose.msra.mxu0 0
    %433 = vmatprep.subr.bf16.mxu0 0
    %434 = vmatpush2.bf16.xpose.msra.mxu0 0
    %435 = vmatprep.subr.bf16.mxu0 0
    %436 = vmatpush2.bf16.xpose.msra.mxu0 0
    %437 = vmatprep.subr.bf16.mxu0 0
    %438 = vmatpush2.bf16.xpose.msra.mxu0 0
    %439 = vmatprep.mubr.bf16.mxu0 0
    %440 = vmatmul.mubr.bf16.gmra.mxu0 %v402
    %v441 = vpop.f32.mrf.mxu0
    %v442 = vadd.f32 0.0, %v441
    %v443 = vpop.f32.mrf.mxu0
    %v444 = vpop.f32.mrf.mxu0
    %v445 = vpop.f32.mrf.mxu0
    %446 = vdwg.mxu0
    %448 = vrot.lane.b32.xlu0 %v295, 96
    %v449 = vpop.permute.xlu0 %448
    %v451 = vsel %vm88, %v295, 0
    %v454 = vsel %vm88, %v449, 0
    %456 = vmatprep.subr.bf16.mxu0 0
    %457 = vmatpush1.bf16.xpose.msra.mxu0 0
    %458 = vmatprep.subr.bf16.mxu0 0
    %459 = vmatpush1.bf16.xpose.msra.mxu0 0
    %460 = vmatprep.subr.bf16.mxu0 0
    %461 = vmatpush1.bf16.xpose.msra.mxu0 0
    %462 = vmatprep.subr.bf16.mxu0 0
    %463 = vmatpush1.bf16.xpose.msra.mxu0 0
    %464 = vmatprep.subr.bf16.mxu0 0
    %465 = vmatpush1.bf16.xpose.msra.mxu0 0
    %466 = vmatprep.subr.bf16.mxu0 0
    %467 = vmatpush1.bf16.xpose.msra.mxu0 0
    %468 = vmatprep.subr.bf16.mxu0 0
    %469 = vmatpush1.bf16.xpose.msra.mxu0 0
    %470 = vmatprep.subr.bf16.mxu0 0
    %471 = vmatpush1.bf16.xpose.msra.mxu0 %v454
    %472 = vmatprep.subr.bf16.mxu0 0
    %473 = vmatpush2.bf16.xpose.msra.mxu0 0
    %474 = vmatprep.subr.bf16.mxu0 0
    %475 = vmatpush2.bf16.xpose.msra.mxu0 0
    %476 = vmatprep.subr.bf16.mxu0 0
    %477 = vmatpush2.bf16.xpose.msra.mxu0 0
    %478 = vmatprep.subr.bf16.mxu0 0
    %479 = vmatpush2.bf16.xpose.msra.mxu0 0
    %480 = vmatprep.subr.bf16.mxu0 0
    %481 = vmatpush2.bf16.xpose.msra.mxu0 0
    %482 = vmatprep.subr.bf16.mxu0 0
    %483 = vmatpush2.bf16.xpose.msra.mxu0 0
    %484 = vmatprep.subr.bf16.mxu0 0
    %485 = vmatpush2.bf16.xpose.msra.mxu0 0
    %486 = vmatprep.subr.bf16.mxu0 0
    %487 = vmatpush2.bf16.xpose.msra.mxu0 0
    %488 = vmatprep.mubr.bf16.mxu0 0
    %489 = vmatmul.mubr.bf16.gmra.mxu0 %v451
    %v490 = vpop.f32.mrf.mxu0
    %v491 = vadd.f32 0.0, %v490
    %v492 = vpop.f32.mrf.mxu0
    %v493 = vpop.f32.mrf.mxu0
    %v494 = vpop.f32.mrf.mxu0
    %495 = vdwg.mxu0
    %497 = vrot.lane.b32.xlu0 %v296, 96
    %v498 = vpop.permute.xlu0 %497
    %v500 = vsel %vm88, %v296, 0
    %v503 = vsel %vm88, %v498, 0
    %505 = vmatprep.subr.bf16.mxu0 0
    %506 = vmatpush1.bf16.xpose.msra.mxu0 0
    %507 = vmatprep.subr.bf16.mxu0 0
    %508 = vmatpush1.bf16.xpose.msra.mxu0 0
    %509 = vmatprep.subr.bf16.mxu0 0
    %510 = vmatpush1.bf16.xpose.msra.mxu0 0
    %511 = vmatprep.subr.bf16.mxu0 0
    %512 = vmatpush1.bf16.xpose.msra.mxu0 0
    %513 = vmatprep.subr.bf16.mxu0 0
    %514 = vmatpush1.bf16.xpose.msra.mxu0 0
    %515 = vmatprep.subr.bf16.mxu0 0
    %516 = vmatpush1.bf16.xpose.msra.mxu0 0
    %517 = vmatprep.subr.bf16.mxu0 0
    %518 = vmatpush1.bf16.xpose.msra.mxu0 0
    %519 = vmatprep.subr.bf16.mxu0 0
    %520 = vmatpush1.bf16.xpose.msra.mxu0 %v503
    %521 = vmatprep.subr.bf16.mxu0 0
    %522 = vmatpush2.bf16.xpose.msra.mxu0 0
    %523 = vmatprep.subr.bf16.mxu0 0
    %524 = vmatpush2.bf16.xpose.msra.mxu0 0
    %525 = vmatprep.subr.bf16.mxu0 0
    %526 = vmatpush2.bf16.xpose.msra.mxu0 0
    %527 = vmatprep.subr.bf16.mxu0 0
    %528 = vmatpush2.bf16.xpose.msra.mxu0 0
    %529 = vmatprep.subr.bf16.mxu0 0
    %530 = vmatpush2.bf16.xpose.msra.mxu0 0
    %531 = vmatprep.subr.bf16.mxu0 0
    %532 = vmatpush2.bf16.xpose.msra.mxu0 0
    %533 = vmatprep.subr.bf16.mxu0 0
    %534 = vmatpush2.bf16.xpose.msra.mxu0 0
    %535 = vmatprep.subr.bf16.mxu0 0
    %536 = vmatpush2.bf16.xpose.msra.mxu0 0
    %537 = vmatprep.mubr.bf16.mxu0 0
    %538 = vmatmul.mubr.bf16.gmra.mxu0 %v500
    %v539 = vpop.f32.mrf.mxu0
    %v540 = vadd.f32 0.0, %v539
    %v541 = vpop.f32.mrf.mxu0
    %v542 = vpop.f32.mrf.mxu0
    %v543 = vpop.f32.mrf.mxu0
    %544 = vdwg.mxu0
    %546 = vrot.lane.b32.xlu0 %v297, 96
    %v547 = vpop.permute.xlu0 %546
    %v549 = vsel %vm88, %v297, 0
    %v552 = vsel %vm88, %v547, 0
    %554 = vmatprep.subr.bf16.mxu0 0
    %555 = vmatpush1.bf16.xpose.msra.mxu0 0
    %556 = vmatprep.subr.bf16.mxu0 0
    %557 = vmatpush1.bf16.xpose.msra.mxu0 0
    %558 = vmatprep.subr.bf16.mxu0 0
    %559 = vmatpush1.bf16.xpose.msra.mxu0 0
    %560 = vmatprep.subr.bf16.mxu0 0
    %561 = vmatpush1.bf16.xpose.msra.mxu0 0
    %562 = vmatprep.subr.bf16.mxu0 0
    %563 = vmatpush1.bf16.xpose.msra.mxu0 0
    %564 = vmatprep.subr.bf16.mxu0 0
    %565 = vmatpush1.bf16.xpose.msra.mxu0 0
    %566 = vmatprep.subr.bf16.mxu0 0
    %567 = vmatpush1.bf16.xpose.msra.mxu0 0
    %568 = vmatprep.subr.bf16.mxu0 0
    %569 = vmatpush1.bf16.xpose.msra.mxu0 %v552
    %570 = vmatprep.subr.bf16.mxu0 0
    %571 = vmatpush2.bf16.xpose.msra.mxu0 0
    %572 = vmatprep.subr.bf16.mxu0 0
    %573 = vmatpush2.bf16.xpose.msra.mxu0 0
    %574 = vmatprep.subr.bf16.mxu0 0
    %575 = vmatpush2.bf16.xpose.msra.mxu0 0
    %576 = vmatprep.subr.bf16.mxu0 0
    %577 = vmatpush2.bf16.xpose.msra.mxu0 0
    %578 = vmatprep.subr.bf16.mxu0 0
    %579 = vmatpush2.bf16.xpose.msra.mxu0 0
    %580 = vmatprep.subr.bf16.mxu0 0
    %581 = vmatpush2.bf16.xpose.msra.mxu0 0
    %582 = vmatprep.subr.bf16.mxu0 0
    %583 = vmatpush2.bf16.xpose.msra.mxu0 0
    %584 = vmatprep.subr.bf16.mxu0 0
    %585 = vmatpush2.bf16.xpose.msra.mxu0 0
    %586 = vmatprep.mubr.bf16.mxu0 0
    %587 = vmatmul.mubr.bf16.gmra.mxu0 %v549
    %v588 = vpop.f32.mrf.mxu0
    %v589 = vadd.f32 0.0, %v588
    %v590 = vpop.f32.mrf.mxu0
    %v591 = vpop.f32.mrf.mxu0
    %v592 = vpop.f32.mrf.mxu0
    %593 = vdwg.mxu0
    %595 = vrot.lane.b32.xlu0 %v298, 96
    %v596 = vpop.permute.xlu0 %595
    %v598 = vsel %vm88, %v298, 0
    %v601 = vsel %vm88, %v596, 0
    %603 = vmatprep.subr.bf16.mxu0 0
    %604 = vmatpush1.bf16.xpose.msra.mxu0 0
    %605 = vmatprep.subr.bf16.mxu0 0
    %606 = vmatpush1.bf16.xpose.msra.mxu0 0
    %607 = vmatprep.subr.bf16.mxu0 0
    %608 = vmatpush1.bf16.xpose.msra.mxu0 0
    %609 = vmatprep.subr.bf16.mxu0 0
    %610 = vmatpush1.bf16.xpose.msra.mxu0 0
    %611 = vmatprep.subr.bf16.mxu0 0
    %612 = vmatpush1.bf16.xpose.msra.mxu0 0
    %613 = vmatprep.subr.bf16.mxu0 0
    %614 = vmatpush1.bf16.xpose.msra.mxu0 0
    %615 = vmatprep.subr.bf16.mxu0 0
    %616 = vmatpush1.bf16.xpose.msra.mxu0 0
    %617 = vmatprep.subr.bf16.mxu0 0
    %618 = vmatpush1.bf16.xpose.msra.mxu0 %v601
    %619 = vmatprep.subr.bf16.mxu0 0
    %620 = vmatpush2.bf16.xpose.msra.mxu0 0
    %621 = vmatprep.subr.bf16.mxu0 0
    %622 = vmatpush2.bf16.xpose.msra.mxu0 0
    %623 = vmatprep.subr.bf16.mxu0 0
    %624 = vmatpush2.bf16.xpose.msra.mxu0 0
    %625 = vmatprep.subr.bf16.mxu0 0
    %626 = vmatpush2.bf16.xpose.msra.mxu0 0
    %627 = vmatprep.subr.bf16.mxu0 0
    %628 = vmatpush2.bf16.xpose.msra.mxu0 0
    %629 = vmatprep.subr.bf16.mxu0 0
    %630 = vmatpush2.bf16.xpose.msra.mxu0 0
    %631 = vmatprep.subr.bf16.mxu0 0
    %632 = vmatpush2.bf16.xpose.msra.mxu0 0
    %633 = vmatprep.subr.bf16.mxu0 0
    %634 = vmatpush2.bf16.xpose.msra.mxu0 0
    %635 = vmatprep.mubr.bf16.mxu0 0
    %636 = vmatmul.mubr.bf16.gmra.mxu0 %v598
    %v637 = vpop.f32.mrf.mxu0
    %v638 = vadd.f32 0.0, %v637
    %v639 = vpop.f32.mrf.mxu0
    %v640 = vpop.f32.mrf.mxu0
    %v641 = vpop.f32.mrf.mxu0
    %642 = vdwg.mxu0
    %644 = vrot.lane.b32.xlu0 %v299, 96
    %v645 = vpop.permute.xlu0 %644
    %v647 = vsel %vm88, %v299, 0
    %v650 = vsel %vm88, %v645, 0
    %652 = vmatprep.subr.bf16.mxu0 0
    %653 = vmatpush1.bf16.xpose.msra.mxu0 0
    %654 = vmatprep.subr.bf16.mxu0 0
    %655 = vmatpush1.bf16.xpose.msra.mxu0 0
    %656 = vmatprep.subr.bf16.mxu0 0
    %657 = vmatpush1.bf16.xpose.msra.mxu0 0
    %658 = vmatprep.subr.bf16.mxu0 0
    %659 = vmatpush1.bf16.xpose.msra.mxu0 0
    %660 = vmatprep.subr.bf16.mxu0 0
    %661 = vmatpush1.bf16.xpose.msra.mxu0 0
    %662 = vmatprep.subr.bf16.mxu0 0
    %663 = vmatpush1.bf16.xpose.msra.mxu0 0
    %664 = vmatprep.subr.bf16.mxu0 0
    %665 = vmatpush1.bf16.xpose.msra.mxu0 0
    %666 = vmatprep.subr.bf16.mxu0 0
    %667 = vmatpush1.bf16.xpose.msra.mxu0 %v650
    %668 = vmatprep.subr.bf16.mxu0 0
    %669 = vmatpush2.bf16.xpose.msra.mxu0 0
    %670 = vmatprep.subr.bf16.mxu0 0
    %671 = vmatpush2.bf16.xpose.msra.mxu0 0
    %672 = vmatprep.subr.bf16.mxu0 0
    %673 = vmatpush2.bf16.xpose.msra.mxu0 0
    %674 = vmatprep.subr.bf16.mxu0 0
    %675 = vmatpush2.bf16.xpose.msra.mxu0 0
    %676 = vmatprep.subr.bf16.mxu0 0
    %677 = vmatpush2.bf16.xpose.msra.mxu0 0
    %678 = vmatprep.subr.bf16.mxu0 0
    %679 = vmatpush2.bf16.xpose.msra.mxu0 0
    %680 = vmatprep.subr.bf16.mxu0 0
    %681 = vmatpush2.bf16.xpose.msra.mxu0 0
    %682 = vmatprep.subr.bf16.mxu0 0
    %683 = vmatpush2.bf16.xpose.msra.mxu0 0
    %684 = vmatprep.mubr.bf16.mxu0 0
    %685 = vmatmul.mubr.bf16.gmra.mxu0 %v647
    %v686 = vpop.f32.mrf.mxu0
    %v687 = vadd.f32 0.0, %v686
    %v688 = vpop.f32.mrf.mxu0
    %v689 = vpop.f32.mrf.mxu0
    %v690 = vpop.f32.mrf.mxu0
    %691 = vdwg.mxu0
    %vm692 = vcmask 64512
    %v693 = vsel %vm692, %v344, -inf
    %694 = vmax.xlane.f32.xlu0 %v693
    %v695 = vpop.xlane.xlu0 %694
    %v696 = vsel %vm692, %v393, -inf
    %697 = vmax.xlane.f32.xlu0 %v696
    %v698 = vpop.xlane.xlu0 %697
    %v699 = vsel %vm692, %v442, -inf
    %700 = vmax.xlane.f32.xlu0 %v699
    %v701 = vpop.xlane.xlu0 %700
    %v702 = vsel %vm692, %v491, -inf
    %703 = vmax.xlane.f32.xlu0 %v702
    %v704 = vpop.xlane.xlu0 %703
    %v705 = vsel %vm692, %v540, -inf
    %706 = vmax.xlane.f32.xlu0 %v705
    %v707 = vpop.xlane.xlu0 %706
    %v708 = vsel %vm692, %v589, -inf
    %709 = vmax.xlane.f32.xlu0 %v708
    %v710 = vpop.xlane.xlu0 %709
    %v711 = vsel %vm692, %v638, -inf
    %712 = vmax.xlane.f32.xlu0 %v711
    %v713 = vpop.xlane.xlu0 %712
    %v714 = vsel %vm692, %v687, -inf
    %715 = vmax.xlane.f32.xlu0 %v714
    %v716 = vpop.xlane.xlu0 %715
    %v717 = vsub.f32 %v344, %v695
    %v718 = vsub.f32 %v393, %v698
    %v719 = vsub.f32 %v442, %v701
    %v720 = vsub.f32 %v491, %v704
    %v721 = vsub.f32 %v540, %v707
    %v722 = vsub.f32 %v589, %v710
    %v723 = vsub.f32 %v638, %v713
    %v724 = vsub.f32 %v687, %v716
    %v725 = vmul.f32 %v717, 1.442695
    %v726 = vpow.pop %v725
    %v727 = vmul.f32 %v718, 1.442695
    %v728 = vpow.pop %v727
    %v729 = vmul.f32 %v719, 1.442695
    %v730 = vpow.pop %v729
    %v731 = vmul.f32 %v720, 1.442695
    %v732 = vpow.pop %v731
    %v733 = vmul.f32 %v721, 1.442695
    %v734 = vpow.pop %v733
    %v735 = vmul.f32 %v722, 1.442695
    %v736 = vpow.pop %v735
    %v737 = vmul.f32 %v723, 1.442695
    %v738 = vpow.pop %v737
    %v739 = vmul.f32 %v724, 1.442695
    %v740 = vpow.pop %v739
    %v741 = vsel %vm692, %v726, 0.0
    %742 = vadd.xlane.f32.xlu0 %v741
    %v743 = vpop.xlane.xlu0 %742
    %v744 = vsel %vm692, %v728, 0.0
    %745 = vadd.xlane.f32.xlu0 %v744
    %v746 = vpop.xlane.xlu0 %745
    %v747 = vsel %vm692, %v730, 0.0
    %748 = vadd.xlane.f32.xlu0 %v747
    %v749 = vpop.xlane.xlu0 %748
    %v750 = vsel %vm692, %v732, 0.0
    %751 = vadd.xlane.f32.xlu0 %v750
    %v752 = vpop.xlane.xlu0 %751
    %v753 = vsel %vm692, %v734, 0.0
    %754 = vadd.xlane.f32.xlu0 %v753
    %v755 = vpop.xlane.xlu0 %754
    %v756 = vsel %vm692, %v736, 0.0
    %757 = vadd.xlane.f32.xlu0 %v756
    %v758 = vpop.xlane.xlu0 %757
    %v759 = vsel %vm692, %v738, 0.0
    %760 = vadd.xlane.f32.xlu0 %v759
    %v761 = vpop.xlane.xlu0 %760
    %v762 = vsel %vm692, %v740, 0.0
    %763 = vadd.xlane.f32.xlu0 %v762
    %v764 = vpop.xlane.xlu0 %763
    %v765 = vrcp.pop %v743
    %v766 = vrcp.pop %v746
    %v767 = vrcp.pop %v749
    %v768 = vrcp.pop %v752
    %v769 = vrcp.pop %v755
    %v770 = vrcp.pop %v758
    %v771 = vrcp.pop %v761
    %v772 = vrcp.pop %v764
    %v773 = vmul.f32 %v726, %v765
    %v774 = vmul.f32 %v728, %v766
    %v775 = vmul.f32 %v730, %v767
    %v776 = vmul.f32 %v732, %v768
    %v777 = vmul.f32 %v734, %v769
    %v778 = vmul.f32 %v736, %v770
    %v779 = vmul.f32 %v738, %v771
    %v780 = vmul.f32 %v740, %v772
    %v781 = vlaneseq
    %v782 = vshrl.u32 %v781, 7
    %v783 = vlaneseq
    %v784 = vand.u32 %v783, 127
    %vm785 = vcmp.le.s32.totalorder %v784, %v782
    %v786 = vsub.f32 %v773, 1.0
    %v787 = vsub.f32 %v774, 1.0
    %v788 = vsub.f32 %v775, 1.0
    %v789 = vsub.f32 %v776, 1.0
    %v790 = vsub.f32 %v777, 1.0
    %v791 = vsub.f32 %v778, 1.0
    %v792 = vsub.f32 %v779, 1.0
    %v793 = vsub.f32 %v780, 1.0
    %v794 = vmul.f32 %v786, 1.442695
    %v795 = vpow.pop %v794
    %v796 = vmul.f32 %v787, 1.442695
    %v797 = vpow.pop %v796
    %v798 = vmul.f32 %v788, 1.442695
    %v799 = vpow.pop %v798
    %v800 = vmul.f32 %v789, 1.442695
    %v801 = vpow.pop %v800
    %v802 = vmul.f32 %v790, 1.442695
    %v803 = vpow.pop %v802
    %v804 = vmul.f32 %v791, 1.442695
    %v805 = vpow.pop %v804
    %v806 = vmul.f32 %v792, 1.442695
    %v807 = vpow.pop %v806
    %v808 = vmul.f32 %v793, 1.442695
    %v809 = vpow.pop %v808
    %v810 = vsel %vm785, %v795, 0.0
    %v811 = vsel %vm785, %v797, 0.0
    %v812 = vsel %vm785, %v799, 0.0
    %v813 = vsel %vm785, %v801, 0.0
    %v814 = vsel %vm785, %v803, 0.0
    %v815 = vsel %vm785, %v805, 0.0
    %v816 = vsel %vm785, %v807, 0.0
    %v817 = vsel %vm785, %v809, 0.0
    %v818 = vsel %vm692, %v810, 0.0
    %819 = vadd.xlane.f32.xlu0 %v818
    %v820 = vpop.xlane.xlu0 %819
    %v821 = vsel %vm692, %v811, 0.0
    %822 = vadd.xlane.f32.xlu0 %v821
    %v823 = vpop.xlane.xlu0 %822
    %v824 = vsel %vm692, %v812, 0.0
    %825 = vadd.xlane.f32.xlu0 %v824
    %v826 = vpop.xlane.xlu0 %825
    %v827 = vsel %vm692, %v813, 0.0
    %828 = vadd.xlane.f32.xlu0 %v827
    %v829 = vpop.xlane.xlu0 %828
    %v830 = vsel %vm692, %v814, 0.0
    %831 = vadd.xlane.f32.xlu0 %v830
    %v832 = vpop.xlane.xlu0 %831
    %v833 = vsel %vm692, %v815, 0.0
    %834 = vadd.xlane.f32.xlu0 %v833
    %v835 = vpop.xlane.xlu0 %834
    %v836 = vsel %vm692, %v816, 0.0
    %837 = vadd.xlane.f32.xlu0 %v836
    %v838 = vpop.xlane.xlu0 %837
    %v839 = vsel %vm692, %v817, 0.0
    %840 = vadd.xlane.f32.xlu0 %v839
    %v841 = vpop.xlane.xlu0 %840
    %v842 = vrcp.pop %v820
    %v843 = vrcp.pop %v823
    %v844 = vrcp.pop %v826
    %v845 = vrcp.pop %v829
    %v846 = vrcp.pop %v832
    %v847 = vrcp.pop %v835
    %v848 = vrcp.pop %v838
    %v849 = vrcp.pop %v841
    %v850 = vmul.f32 %v810, %v842
    %v851 = vmul.f32 %v811, %v843
    %v852 = vmul.f32 %v812, %v844
    %v853 = vmul.f32 %v813, %v845
    %v854 = vmul.f32 %v814, %v846
    %v855 = vmul.f32 %v815, %v847
    %v856 = vmul.f32 %v816, %v848
    %v857 = vmul.f32 %v817, %v849
    %v858 = vpack.c.bf16 %v850, %v850
    %v859 = vpack.c.bf16 %v851, %v851
    %v860 = vpack.c.bf16 %v852, %v852
    %v861 = vpack.c.bf16 %v853, %v853
    %v862 = vpack.c.bf16 %v854, %v854
    %v863 = vpack.c.bf16 %v855, %v855
    %v864 = vpack.c.bf16 %v856, %v856
    %v865 = vpack.c.bf16 %v857, %v857
    %866 = vrot.lane.b32.xlu0 %v292, 64
    %v867 = vpop.permute.xlu0 %866
    %v869 = vsel %vm692, %v858, 0
    %vm871 = vcmask 1043456
    %v873 = vsel %vm871, %v867, 0
    %875 = vmatprep.subr.bf16.mxu0 0
    %876 = vmatpush1.bf16.msra.mxu0 0
    %877 = vmatprep.subr.bf16.mxu0 0
    %878 = vmatpush1.bf16.msra.mxu0 0
    %879 = vmatprep.subr.bf16.mxu0 0
    %880 = vmatpush1.bf16.msra.mxu0 0
    %881 = vmatprep.subr.bf16.mxu0 0
    %882 = vmatpush1.bf16.msra.mxu0 0
    %883 = vmatprep.subr.bf16.mxu0 0
    %884 = vmatpush1.bf16.msra.mxu0 0
    %885 = vmatprep.subr.bf16.mxu0 0
    %886 = vmatpush1.bf16.msra.mxu0 0
    %887 = vmatprep.subr.bf16.mxu0 0
    %888 = vmatpush1.bf16.msra.mxu0 0
    %889 = vmatprep.subr.bf16.mxu0 0
    %890 = vmatpush1.bf16.msra.mxu0 %v873
    %891 = vmatprep.subr.bf16.mxu0 0
    %892 = vmatpush2.bf16.msra.mxu0 0
    %893 = vmatprep.subr.bf16.mxu0 0
    %894 = vmatpush2.bf16.msra.mxu0 0
    %895 = vmatprep.subr.bf16.mxu0 0
    %896 = vmatpush2.bf16.msra.mxu0 0
    %897 = vmatprep.subr.bf16.mxu0 0
    %898 = vmatpush2.bf16.msra.mxu0 0
    %899 = vmatprep.subr.bf16.mxu0 0
    %900 = vmatpush2.bf16.msra.mxu0 0
    %901 = vmatprep.subr.bf16.mxu0 0
    %902 = vmatpush2.bf16.msra.mxu0 0
    %903 = vmatprep.subr.bf16.mxu0 0
    %904 = vmatpush2.bf16.msra.mxu0 0
    %905 = vmatprep.subr.bf16.mxu0 0
    %906 = vmatpush2.bf16.msra.mxu0 0
    %907 = vmatprep.mubr.bf16.mxu0 0
    %908 = vmatmul.mubr.bf16.gmra.mxu0 %v869
    %v909 = vpop.f32.mrf.mxu0
    %v910 = vadd.f32 0.0, %v909
    %v911 = vpop.f32.mrf.mxu0
    %v912 = vpop.f32.mrf.mxu0
    %v913 = vpop.f32.mrf.mxu0
    %914 = vdwg.mxu0
    %915 = vrot.lane.b32.xlu0 %v293, 64
    %v916 = vpop.permute.xlu0 %915
    %v918 = vsel %vm692, %v859, 0
    %v921 = vsel %vm871, %v916, 0
    %923 = vmatprep.subr.bf16.mxu0 0
    %924 = vmatpush1.bf16.msra.mxu0 0
    %925 = vmatprep.subr.bf16.mxu0 0
    %926 = vmatpush1.bf16.msra.mxu0 0
    %927 = vmatprep.subr.bf16.mxu0 0
    %928 = vmatpush1.bf16.msra.mxu0 0
    %929 = vmatprep.subr.bf16.mxu0 0
    %930 = vmatpush1.bf16.msra.mxu0 0
    %931 = vmatprep.subr.bf16.mxu0 0
    %932 = vmatpush1.bf16.msra.mxu0 0
    %933 = vmatprep.subr.bf16.mxu0 0
    %934 = vmatpush1.bf16.msra.mxu0 0
    %935 = vmatprep.subr.bf16.mxu0 0
    %936 = vmatpush1.bf16.msra.mxu0 0
    %937 = vmatprep.subr.bf16.mxu0 0
    %938 = vmatpush1.bf16.msra.mxu0 %v921
    %939 = vmatprep.subr.bf16.mxu0 0
    %940 = vmatpush2.bf16.msra.mxu0 0
    %941 = vmatprep.subr.bf16.mxu0 0
    %942 = vmatpush2.bf16.msra.mxu0 0
    %943 = vmatprep.subr.bf16.mxu0 0
    %944 = vmatpush2.bf16.msra.mxu0 0
    %945 = vmatprep.subr.bf16.mxu0 0
    %946 = vmatpush2.bf16.msra.mxu0 0
    %947 = vmatprep.subr.bf16.mxu0 0
    %948 = vmatpush2.bf16.msra.mxu0 0
    %949 = vmatprep.subr.bf16.mxu0 0
    %950 = vmatpush2.bf16.msra.mxu0 0
    %951 = vmatprep.subr.bf16.mxu0 0
    %952 = vmatpush2.bf16.msra.mxu0 0
    %953 = vmatprep.subr.bf16.mxu0 0
    %954 = vmatpush2.bf16.msra.mxu0 0
    %955 = vmatprep.mubr.bf16.mxu0 0
    %956 = vmatmul.mubr.bf16.gmra.mxu0 %v918
    %v957 = vpop.f32.mrf.mxu0
    %v958 = vadd.f32 0.0, %v957
    %v959 = vpop.f32.mrf.mxu0
    %v960 = vpop.f32.mrf.mxu0
    %v961 = vpop.f32.mrf.mxu0
    %962 = vdwg.mxu0
    %963 = vrot.lane.b32.xlu0 %v294, 64
    %v964 = vpop.permute.xlu0 %963
    %v966 = vsel %vm692, %v860, 0
    %v969 = vsel %vm871, %v964, 0
    %971 = vmatprep.subr.bf16.mxu0 0
    %972 = vmatpush1.bf16.msra.mxu0 0
    %973 = vmatprep.subr.bf16.mxu0 0
    %974 = vmatpush1.bf16.msra.mxu0 0
    %975 = vmatprep.subr.bf16.mxu0 0
    %976 = vmatpush1.bf16.msra.mxu0 0
    %977 = vmatprep.subr.bf16.mxu0 0
    %978 = vmatpush1.bf16.msra.mxu0 0
    %979 = vmatprep.subr.bf16.mxu0 0
    %980 = vmatpush1.bf16.msra.mxu0 0
    %981 = vmatprep.subr.bf16.mxu0 0
    %982 = vmatpush1.bf16.msra.mxu0 0
    %983 = vmatprep.subr.bf16.mxu0 0
    %984 = vmatpush1.bf16.msra.mxu0 0
    %985 = vmatprep.subr.bf16.mxu0 0
    %986 = vmatpush1.bf16.msra.mxu0 %v969
    %987 = vmatprep.subr.bf16.mxu0 0
    %988 = vmatpush2.bf16.msra.mxu0 0
    %989 = vmatprep.subr.bf16.mxu0 0
    %990 = vmatpush2.bf16.msra.mxu0 0
    %991 = vmatprep.subr.bf16.mxu0 0
    %992 = vmatpush2.bf16.msra.mxu0 0
    %993 = vmatprep.subr.bf16.mxu0 0
    %994 = vmatpush2.bf16.msra.mxu0 0
    %995 = vmatprep.subr.bf16.mxu0 0
    %996 = vmatpush2.bf16.msra.mxu0 0
    %997 = vmatprep.subr.bf16.mxu0 0
    %998 = vmatpush2.bf16.msra.mxu0 0
    %999 = vmatprep.subr.bf16.mxu0 0
    %1000 = vmatpush2.bf16.msra.mxu0 0
    %1001 = vmatprep.subr.bf16.mxu0 0
    %1002 = vmatpush2.bf16.msra.mxu0 0
    %1003 = vmatprep.mubr.bf16.mxu0 0
    %1004 = vmatmul.mubr.bf16.gmra.mxu0 %v966
    %v1005 = vpop.f32.mrf.mxu0
    %v1006 = vadd.f32 0.0, %v1005
    %v1007 = vpop.f32.mrf.mxu0
    %v1008 = vpop.f32.mrf.mxu0
    %v1009 = vpop.f32.mrf.mxu0
    %1010 = vdwg.mxu0
    %1011 = vrot.lane.b32.xlu0 %v295, 64
    %v1012 = vpop.permute.xlu0 %1011
    %v1014 = vsel %vm692, %v861, 0
    %v1017 = vsel %vm871, %v1012, 0
    %1019 = vmatprep.subr.bf16.mxu0 0
    %1020 = vmatpush1.bf16.msra.mxu0 0
    %1021 = vmatprep.subr.bf16.mxu0 0
    %1022 = vmatpush1.bf16.msra.mxu0 0
    %1023 = vmatprep.subr.bf16.mxu0 0
    %1024 = vmatpush1.bf16.msra.mxu0 0
    %1025 = vmatprep.subr.bf16.mxu0 0
    %1026 = vmatpush1.bf16.msra.mxu0 0
    %1027 = vmatprep.subr.bf16.mxu0 0
    %1028 = vmatpush1.bf16.msra.mxu0 0
    %1029 = vmatprep.subr.bf16.mxu0 0
    %1030 = vmatpush1.bf16.msra.mxu0 0
    %1031 = vmatprep.subr.bf16.mxu0 0
    %1032 = vmatpush1.bf16.msra.mxu0 0
    %1033 = vmatprep.subr.bf16.mxu0 0
    %1034 = vmatpush1.bf16.msra.mxu0 %v1017
    %1035 = vmatprep.subr.bf16.mxu0 0
    %1036 = vmatpush2.bf16.msra.mxu0 0
    %1037 = vmatprep.subr.bf16.mxu0 0
    %1038 = vmatpush2.bf16.msra.mxu0 0
    %1039 = vmatprep.subr.bf16.mxu0 0
    %1040 = vmatpush2.bf16.msra.mxu0 0
    %1041 = vmatprep.subr.bf16.mxu0 0
    %1042 = vmatpush2.bf16.msra.mxu0 0
    %1043 = vmatprep.subr.bf16.mxu0 0
    %1044 = vmatpush2.bf16.msra.mxu0 0
    %1045 = vmatprep.subr.bf16.mxu0 0
    %1046 = vmatpush2.bf16.msra.mxu0 0
    %1047 = vmatprep.subr.bf16.mxu0 0
    %1048 = vmatpush2.bf16.msra.mxu0 0
    %1049 = vmatprep.subr.bf16.mxu0 0
    %1050 = vmatpush2.bf16.msra.mxu0 0
    %1051 = vmatprep.mubr.bf16.mxu0 0
    %1052 = vmatmul.mubr.bf16.gmra.mxu0 %v1014
    %v1053 = vpop.f32.mrf.mxu0
    %v1054 = vadd.f32 0.0, %v1053
    %v1055 = vpop.f32.mrf.mxu0
    %v1056 = vpop.f32.mrf.mxu0
    %v1057 = vpop.f32.mrf.mxu0
    %1058 = vdwg.mxu0
    %1059 = vrot.lane.b32.xlu0 %v296, 64
    %v1060 = vpop.permute.xlu0 %1059
    %v1062 = vsel %vm692, %v862, 0
    %v1065 = vsel %vm871, %v1060, 0
    %1067 = vmatprep.subr.bf16.mxu0 0
    %1068 = vmatpush1.bf16.msra.mxu0 0
    %1069 = vmatprep.subr.bf16.mxu0 0
    %1070 = vmatpush1.bf16.msra.mxu0 0
    %1071 = vmatprep.subr.bf16.mxu0 0
    %1072 = vmatpush1.bf16.msra.mxu0 0
    %1073 = vmatprep.subr.bf16.mxu0 0
    %1074 = vmatpush1.bf16.msra.mxu0 0
    %1075 = vmatprep.subr.bf16.mxu0 0
    %1076 = vmatpush1.bf16.msra.mxu0 0
    %1077 = vmatprep.subr.bf16.mxu0 0
    %1078 = vmatpush1.bf16.msra.mxu0 0
    %1079 = vmatprep.subr.bf16.mxu0 0
    %1080 = vmatpush1.bf16.msra.mxu0 0
    %1081 = vmatprep.subr.bf16.mxu0 0
    %1082 = vmatpush1.bf16.msra.mxu0 %v1065
    %1083 = vmatprep.subr.bf16.mxu0 0
    %1084 = vmatpush2.bf16.msra.mxu0 0
    %1085 = vmatprep.subr.bf16.mxu0 0
    %1086 = vmatpush2.bf16.msra.mxu0 0
    %1087 = vmatprep.subr.bf16.mxu0 0
    %1088 = vmatpush2.bf16.msra.mxu0 0
    %1089 = vmatprep.subr.bf16.mxu0 0
    %1090 = vmatpush2.bf16.msra.mxu0 0
    %1091 = vmatprep.subr.bf16.mxu0 0
    %1092 = vmatpush2.bf16.msra.mxu0 0
    %1093 = vmatprep.subr.bf16.mxu0 0
    %1094 = vmatpush2.bf16.msra.mxu0 0
    %1095 = vmatprep.subr.bf16.mxu0 0
    %1096 = vmatpush2.bf16.msra.mxu0 0
    %1097 = vmatprep.subr.bf16.mxu0 0
    %1098 = vmatpush2.bf16.msra.mxu0 0
    %1099 = vmatprep.mubr.bf16.mxu0 0
    %1100 = vmatmul.mubr.bf16.gmra.mxu0 %v1062
    %v1101 = vpop.f32.mrf.mxu0
    %v1102 = vadd.f32 0.0, %v1101
    %v1103 = vpop.f32.mrf.mxu0
    %v1104 = vpop.f32.mrf.mxu0
    %v1105 = vpop.f32.mrf.mxu0
    %1106 = vdwg.mxu0
    %1107 = vrot.lane.b32.xlu0 %v297, 64
    %v1108 = vpop.permute.xlu0 %1107
    %v1110 = vsel %vm692, %v863, 0
    %v1113 = vsel %vm871, %v1108, 0
    %1115 = vmatprep.subr.bf16.mxu0 0
    %1116 = vmatpush1.bf16.msra.mxu0 0
    %1117 = vmatprep.subr.bf16.mxu0 0
    %1118 = vmatpush1.bf16.msra.mxu0 0
    %1119 = vmatprep.subr.bf16.mxu0 0
    %1120 = vmatpush1.bf16.msra.mxu0 0
    %1121 = vmatprep.subr.bf16.mxu0 0
    %1122 = vmatpush1.bf16.msra.mxu0 0
    %1123 = vmatprep.subr.bf16.mxu0 0
    %1124 = vmatpush1.bf16.msra.mxu0 0
    %1125 = vmatprep.subr.bf16.mxu0 0
    %1126 = vmatpush1.bf16.msra.mxu0 0
    %1127 = vmatprep.subr.bf16.mxu0 0
    %1128 = vmatpush1.bf16.msra.mxu0 0
    %1129 = vmatprep.subr.bf16.mxu0 0
    %1130 = vmatpush1.bf16.msra.mxu0 %v1113
    %1131 = vmatprep.subr.bf16.mxu0 0
    %1132 = vmatpush2.bf16.msra.mxu0 0
    %1133 = vmatprep.subr.bf16.mxu0 0
    %1134 = vmatpush2.bf16.msra.mxu0 0
    %1135 = vmatprep.subr.bf16.mxu0 0
    %1136 = vmatpush2.bf16.msra.mxu0 0
    %1137 = vmatprep.subr.bf16.mxu0 0
    %1138 = vmatpush2.bf16.msra.mxu0 0
    %1139 = vmatprep.subr.bf16.mxu0 0
    %1140 = vmatpush2.bf16.msra.mxu0 0
    %1141 = vmatprep.subr.bf16.mxu0 0
    %1142 = vmatpush2.bf16.msra.mxu0 0
    %1143 = vmatprep.subr.bf16.mxu0 0
    %1144 = vmatpush2.bf16.msra.mxu0 0
    %1145 = vmatprep.subr.bf16.mxu0 0
    %1146 = vmatpush2.bf16.msra.mxu0 0
    %1147 = vmatprep.mubr.bf16.mxu0 0
    %1148 = vmatmul.mubr.bf16.gmra.mxu0 %v1110
    %v1149 = vpop.f32.mrf.mxu0
    %v1150 = vadd.f32 0.0, %v1149
    %v1151 = vpop.f32.mrf.mxu0
    %v1152 = vpop.f32.mrf.mxu0
    %v1153 = vpop.f32.mrf.mxu0
    %1154 = vdwg.mxu0
    %1155 = vrot.lane.b32.xlu0 %v298, 64
    %v1156 = vpop.permute.xlu0 %1155
    %v1158 = vsel %vm692, %v864, 0
    %v1161 = vsel %vm871, %v1156, 0
    %1163 = vmatprep.subr.bf16.mxu0 0
    %1164 = vmatpush1.bf16.msra.mxu0 0
    %1165 = vmatprep.subr.bf16.mxu0 0
    %1166 = vmatpush1.bf16.msra.mxu0 0
    %1167 = vmatprep.subr.bf16.mxu0 0
    %1168 = vmatpush1.bf16.msra.mxu0 0
    %1169 = vmatprep.subr.bf16.mxu0 0
    %1170 = vmatpush1.bf16.msra.mxu0 0
    %1171 = vmatprep.subr.bf16.mxu0 0
    %1172 = vmatpush1.bf16.msra.mxu0 0
    %1173 = vmatprep.subr.bf16.mxu0 0
    %1174 = vmatpush1.bf16.msra.mxu0 0
    %1175 = vmatprep.subr.bf16.mxu0 0
    %1176 = vmatpush1.bf16.msra.mxu0 0
    %1177 = vmatprep.subr.bf16.mxu0 0
    %1178 = vmatpush1.bf16.msra.mxu0 %v1161
    %1179 = vmatprep.subr.bf16.mxu0 0
    %1180 = vmatpush2.bf16.msra.mxu0 0
    %1181 = vmatprep.subr.bf16.mxu0 0
    %1182 = vmatpush2.bf16.msra.mxu0 0
    %1183 = vmatprep.subr.bf16.mxu0 0
    %1184 = vmatpush2.bf16.msra.mxu0 0
    %1185 = vmatprep.subr.bf16.mxu0 0
    %1186 = vmatpush2.bf16.msra.mxu0 0
    %1187 = vmatprep.subr.bf16.mxu0 0
    %1188 = vmatpush2.bf16.msra.mxu0 0
    %1189 = vmatprep.subr.bf16.mxu0 0
    %1190 = vmatpush2.bf16.msra.mxu0 0
    %1191 = vmatprep.subr.bf16.mxu0 0
    %1192 = vmatpush2.bf16.msra.mxu0 0
    %1193 = vmatprep.subr.bf16.mxu0 0
    %1194 = vmatpush2.bf16.msra.mxu0 0
    %1195 = vmatprep.mubr.bf16.mxu0 0
    %1196 = vmatmul.mubr.bf16.gmra.mxu0 %v1158
    %v1197 = vpop.f32.mrf.mxu0
    %v1198 = vadd.f32 0.0, %v1197
    %v1199 = vpop.f32.mrf.mxu0
    %v1200 = vpop.f32.mrf.mxu0
    %v1201 = vpop.f32.mrf.mxu0
    %1202 = vdwg.mxu0
    %1203 = vrot.lane.b32.xlu0 %v299, 64
    %v1204 = vpop.permute.xlu0 %1203
    %v1206 = vsel %vm692, %v865, 0
    %v1209 = vsel %vm871, %v1204, 0
    %1211 = vmatprep.subr.bf16.mxu0 0
    %1212 = vmatpush1.bf16.msra.mxu0 0
    %1213 = vmatprep.subr.bf16.mxu0 0
    %1214 = vmatpush1.bf16.msra.mxu0 0
    %1215 = vmatprep.subr.bf16.mxu0 0
    %1216 = vmatpush1.bf16.msra.mxu0 0
    %1217 = vmatprep.subr.bf16.mxu0 0
    %1218 = vmatpush1.bf16.msra.mxu0 0
    %1219 = vmatprep.subr.bf16.mxu0 0
    %1220 = vmatpush1.bf16.msra.mxu0 0
    %1221 = vmatprep.subr.bf16.mxu0 0
    %1222 = vmatpush1.bf16.msra.mxu0 0
    %1223 = vmatprep.subr.bf16.mxu0 0
    %1224 = vmatpush1.bf16.msra.mxu0 0
    %1225 = vmatprep.subr.bf16.mxu0 0
    %1226 = vmatpush1.bf16.msra.mxu0 %v1209
    %1227 = vmatprep.subr.bf16.mxu0 0
    %1228 = vmatpush2.bf16.msra.mxu0 0
    %1229 = vmatprep.subr.bf16.mxu0 0
    %1230 = vmatpush2.bf16.msra.mxu0 0
    %1231 = vmatprep.subr.bf16.mxu0 0
    %1232 = vmatpush2.bf16.msra.mxu0 0
    %1233 = vmatprep.subr.bf16.mxu0 0
    %1234 = vmatpush2.bf16.msra.mxu0 0
    %1235 = vmatprep.subr.bf16.mxu0 0
    %1236 = vmatpush2.bf16.msra.mxu0 0
    %1237 = vmatprep.subr.bf16.mxu0 0
    %1238 = vmatpush2.bf16.msra.mxu0 0
    %1239 = vmatprep.subr.bf16.mxu0 0
    %1240 = vmatpush2.bf16.msra.mxu0 0
    %1241 = vmatprep.subr.bf16.mxu0 0
    %1242 = vmatpush2.bf16.msra.mxu0 0
    %1243 = vmatprep.mubr.bf16.mxu0 0
    %1244 = vmatmul.mubr.bf16.gmra.mxu0 %v1206
    %v1245 = vpop.f32.mrf.mxu0
    %v1246 = vadd.f32 0.0, %v1245
    %v1247 = vpop.f32.mrf.mxu0
    %v1248 = vpop.f32.mrf.mxu0
    %v1249 = vpop.f32.mrf.mxu0
    %1250 = vdwg.mxu0
    %v1251 = vpack.c.bf16 %v958, %v910
    %v1252 = vpack.c.bf16 %v1054, %v1006
    %v1253 = vpack.c.bf16 %v1150, %v1102
    %v1254 = vpack.c.bf16 %v1246, %v1198
    %v1255 = vld [vmem:[#allocation7] sm:$0xf]
    %v1256 = vld [vmem:[#allocation7 + $0x4] sm:$0xf]
    %v1257 = vld [vmem:[#allocation7 + $0x8] sm:$0xf]
    %v1258 = vld [vmem:[#allocation7 + $0xc] sm:$0xf]
    %v1259 = vld [vmem:[#allocation7 + $0x10] sm:$0xf]
    %v1260 = vld [vmem:[#allocation7 + $0x14] sm:$0xf]
    %v1261 = vld [vmem:[#allocation7 + $0x18] sm:$0xf]
    %v1262 = vld [vmem:[#allocation7 + $0x1c] sm:$0xf]
    %v1263 = vld [vmem:[#allocation7 + $0x20] sm:$0xf]
    %v1264 = vld [vmem:[#allocation7 + $0x24] sm:$0xf]
    %v1265 = vld [vmem:[#allocation7 + $0x28] sm:$0xf]
    %v1266 = vld [vmem:[#allocation7 + $0x2c] sm:$0xf]
    %v1267 = vld [vmem:[#allocation7 + $0x30] sm:$0xf]
    %v1268 = vld [vmem:[#allocation7 + $0x34] sm:$0xf]
    %v1269 = vld [vmem:[#allocation7 + $0x38] sm:$0xf]
    %v1270 = vld [vmem:[#allocation7 + $0x3c] sm:$0xf]
    %v1275 = vunpack.c.l.b16 %v1255
    %v1276 = vunpack.c.l.b16 %v1256
    %v1277 = vunpack.c.l.b16 %v1257
    %v1278 = vunpack.c.l.b16 %v1258
    %v1279 = vpack.c.b16 %v1276, %v1275
    %v1280 = vpack.c.b16 %v1278, %v1277
    %v1284 = vsel %vm88, %v1251, 0
    %1286 = vmatprep.subr.bf16.mxu0 0
    %1287 = vmatpush1.bf16.msra.mxu0 0
    %1288 = vmatprep.subr.bf16.mxu0 0
    %1289 = vmatpush1.bf16.msra.mxu0 0
    %1290 = vmatprep.subr.bf16.mxu0 0
    %1291 = vmatpush1.bf16.msra.mxu0 0
    %1292 = vmatprep.subr.bf16.mxu0 0
    %1293 = vmatpush1.bf16.msra.mxu0 0
    %1294 = vmatprep.subr.bf16.mxu0 0
    %1295 = vmatpush1.bf16.msra.mxu0 0
    %1296 = vmatprep.subr.bf16.mxu0 0
    %1297 = vmatpush1.bf16.msra.mxu0 0
    %1298 = vmatprep.subr.bf16.mxu0 0
    %1299 = vmatpush1.bf16.msra.mxu0 %v1280
    %1300 = vmatprep.subr.bf16.mxu0 0
    %1301 = vmatpush1.bf16.msra.mxu0 %v1279
    %1302 = vmatprep.subr.bf16.mxu0 0
    %1303 = vmatpush2.bf16.msra.mxu0 0
    %1304 = vmatprep.subr.bf16.mxu0 0
    %1305 = vmatpush2.bf16.msra.mxu0 0
    %1306 = vmatprep.subr.bf16.mxu0 0
    %1307 = vmatpush2.bf16.msra.mxu0 0
    %1308 = vmatprep.subr.bf16.mxu0 0
    %1309 = vmatpush2.bf16.msra.mxu0 0
    %1310 = vmatprep.subr.bf16.mxu0 0
    %1311 = vmatpush2.bf16.msra.mxu0 0
    %1312 = vmatprep.subr.bf16.mxu0 0
    %1313 = vmatpush2.bf16.msra.mxu0 0
    %1314 = vmatprep.subr.bf16.mxu0 0
    %1315 = vmatpush2.bf16.msra.mxu0 0
    %1316 = vmatprep.subr.bf16.mxu0 0
    %1317 = vmatpush2.bf16.msra.mxu0 0
    %1318 = vmatprep.mubr.bf16.mxu0 0
    %1319 = vmatmul.mubr.bf16.gmra.mxu0 %v1284
    %v1320 = vpop.f32.mrf.mxu0
    %v1321 = vadd.f32 0.0, %v1320
    %v1322 = vpop.f32.mrf.mxu0
    %v1323 = vpop.f32.mrf.mxu0
    %v1324 = vadd.f32 0.0, %v1323
    %v1325 = vpop.f32.mrf.mxu0
    %1326 = vdwg.mxu0
    %v1331 = vunpack.c.l.b16 %v1259
    %v1332 = vunpack.c.l.b16 %v1260
    %v1333 = vunpack.c.l.b16 %v1261
    %v1334 = vunpack.c.l.b16 %v1262
    %v1335 = vpack.c.b16 %v1332, %v1331
    %v1336 = vpack.c.b16 %v1334, %v1333
    %v1340 = vsel %vm88, %v1252, 0
    %1342 = vmatprep.subr.bf16.mxu0 0
    %1343 = vmatpush1.bf16.msra.mxu0 0
    %1344 = vmatprep.subr.bf16.mxu0 0
    %1345 = vmatpush1.bf16.msra.mxu0 0
    %1346 = vmatprep.subr.bf16.mxu0 0
    %1347 = vmatpush1.bf16.msra.mxu0 0
    %1348 = vmatprep.subr.bf16.mxu0 0
    %1349 = vmatpush1.bf16.msra.mxu0 0
    %1350 = vmatprep.subr.bf16.mxu0 0
    %1351 = vmatpush1.bf16.msra.mxu0 0
    %1352 = vmatprep.subr.bf16.mxu0 0
    %1353 = vmatpush1.bf16.msra.mxu0 0
    %1354 = vmatprep.subr.bf16.mxu0 0
    %1355 = vmatpush1.bf16.msra.mxu0 %v1336
    %1356 = vmatprep.subr.bf16.mxu0 0
    %1357 = vmatpush1.bf16.msra.mxu0 %v1335
    %1358 = vmatprep.subr.bf16.mxu0 0
    %1359 = vmatpush2.bf16.msra.mxu0 0
    %1360 = vmatprep.subr.bf16.mxu0 0
    %1361 = vmatpush2.bf16.msra.mxu0 0
    %1362 = vmatprep.subr.bf16.mxu0 0
    %1363 = vmatpush2.bf16.msra.mxu0 0
    %1364 = vmatprep.subr.bf16.mxu0 0
    %1365 = vmatpush2.bf16.msra.mxu0 0
    %1366 = vmatprep.subr.bf16.mxu0 0
    %1367 = vmatpush2.bf16.msra.mxu0 0
    %1368 = vmatprep.subr.bf16.mxu0 0
    %1369 = vmatpush2.bf16.msra.mxu0 0
    %1370 = vmatprep.subr.bf16.mxu0 0
    %1371 = vmatpush2.bf16.msra.mxu0 0
    %1372 = vmatprep.subr.bf16.mxu0 0
    %1373 = vmatpush2.bf16.msra.mxu0 0
    %1374 = vmatprep.mubr.bf16.mxu0 0
    %1375 = vmatmul.mubr.bf16.gmra.mxu0 %v1340
    %v1376 = vpop.f32.mrf.mxu0
    %v1377 = vadd.f32 0.0, %v1376
    %v1378 = vpop.f32.mrf.mxu0
    %v1379 = vpop.f32.mrf.mxu0
    %v1380 = vadd.f32 0.0, %v1379
    %v1381 = vpop.f32.mrf.mxu0
    %1382 = vdwg.mxu0
    %v1387 = vunpack.c.l.b16 %v1263
    %v1388 = vunpack.c.l.b16 %v1264
    %v1389 = vunpack.c.l.b16 %v1265
    %v1390 = vunpack.c.l.b16 %v1266
    %v1391 = vpack.c.b16 %v1388, %v1387
    %v1392 = vpack.c.b16 %v1390, %v1389
    %v1396 = vsel %vm88, %v1253, 0
    %1398 = vmatprep.subr.bf16.mxu0 0
    %1399 = vmatpush1.bf16.msra.mxu0 0
    %1400 = vmatprep.subr.bf16.mxu0 0
    %1401 = vmatpush1.bf16.msra.mxu0 0
    %1402 = vmatprep.subr.bf16.mxu0 0
    %1403 = vmatpush1.bf16.msra.mxu0 0
    %1404 = vmatprep.subr.bf16.mxu0 0
    %1405 = vmatpush1.bf16.msra.mxu0 0
    %1406 = vmatprep.subr.bf16.mxu0 0
    %1407 = vmatpush1.bf16.msra.mxu0 0
    %1408 = vmatprep.subr.bf16.mxu0 0
    %1409 = vmatpush1.bf16.msra.mxu0 0
    %1410 = vmatprep.subr.bf16.mxu0 0
    %1411 = vmatpush1.bf16.msra.mxu0 %v1392
    %1412 = vmatprep.subr.bf16.mxu0 0
    %1413 = vmatpush1.bf16.msra.mxu0 %v1391
    %1414 = vmatprep.subr.bf16.mxu0 0
    %1415 = vmatpush2.bf16.msra.mxu0 0
    %1416 = vmatprep.subr.bf16.mxu0 0
    %1417 = vmatpush2.bf16.msra.mxu0 0
    %1418 = vmatprep.subr.bf16.mxu0 0
    %1419 = vmatpush2.bf16.msra.mxu0 0
    %1420 = vmatprep.subr.bf16.mxu0 0
    %1421 = vmatpush2.bf16.msra.mxu0 0
    %1422 = vmatprep.subr.bf16.mxu0 0
    %1423 = vmatpush2.bf16.msra.mxu0 0
    %1424 = vmatprep.subr.bf16.mxu0 0
    %1425 = vmatpush2.bf16.msra.mxu0 0
    %1426 = vmatprep.subr.bf16.mxu0 0
    %1427 = vmatpush2.bf16.msra.mxu0 0
    %1428 = vmatprep.subr.bf16.mxu0 0
    %1429 = vmatpush2.bf16.msra.mxu0 0
    %1430 = vmatprep.mubr.bf16.mxu0 0
    %1431 = vmatmul.mubr.bf16.gmra.mxu0 %v1396
    %v1432 = vpop.f32.mrf.mxu0
    %v1433 = vadd.f32 0.0, %v1432
    %v1434 = vpop.f32.mrf.mxu0
    %v1435 = vpop.f32.mrf.mxu0
    %v1436 = vadd.f32 0.0, %v1435
    %v1437 = vpop.f32.mrf.mxu0
    %1438 = vdwg.mxu0
    %v1443 = vunpack.c.l.b16 %v1267
    %v1444 = vunpack.c.l.b16 %v1268
    %v1445 = vunpack.c.l.b16 %v1269
    %v1446 = vunpack.c.l.b16 %v1270
    %v1447 = vpack.c.b16 %v1444, %v1443
    %v1448 = vpack.c.b16 %v1446, %v1445
    %v1452 = vsel %vm88, %v1254, 0
    %1454 = vmatprep.subr.bf16.mxu0 0
    %1455 = vmatpush1.bf16.msra.mxu0 0
    %1456 = vmatprep.subr.bf16.mxu0 0
    %1457 = vmatpush1.bf16.msra.mxu0 0
    %1458 = vmatprep.subr.bf16.mxu0 0
    %1459 = vmatpush1.bf16.msra.mxu0 0
    %1460 = vmatprep.subr.bf16.mxu0 0
    %1461 = vmatpush1.bf16.msra.mxu0 0
    %1462 = vmatprep.subr.bf16.mxu0 0
    %1463 = vmatpush1.bf16.msra.mxu0 0
    %1464 = vmatprep.subr.bf16.mxu0 0
    %1465 = vmatpush1.bf16.msra.mxu0 0
    %1466 = vmatprep.subr.bf16.mxu0 0
    %1467 = vmatpush1.bf16.msra.mxu0 %v1448
    %1468 = vmatprep.subr.bf16.mxu0 0
    %1469 = vmatpush1.bf16.msra.mxu0 %v1447
    %1470 = vmatprep.subr.bf16.mxu0 0
    %1471 = vmatpush2.bf16.msra.mxu0 0
    %1472 = vmatprep.subr.bf16.mxu0 0
    %1473 = vmatpush2.bf16.msra.mxu0 0
    %1474 = vmatprep.subr.bf16.mxu0 0
    %1475 = vmatpush2.bf16.msra.mxu0 0
    %1476 = vmatprep.subr.bf16.mxu0 0
    %1477 = vmatpush2.bf16.msra.mxu0 0
    %1478 = vmatprep.subr.bf16.mxu0 0
    %1479 = vmatpush2.bf16.msra.mxu0 0
    %1480 = vmatprep.subr.bf16.mxu0 0
    %1481 = vmatpush2.bf16.msra.mxu0 0
    %1482 = vmatprep.subr.bf16.mxu0 0
    %1483 = vmatpush2.bf16.msra.mxu0 0
    %1484 = vmatprep.subr.bf16.mxu0 0
    %1485 = vmatpush2.bf16.msra.mxu0 0
    %1486 = vmatprep.mubr.bf16.mxu0 0
    %1487 = vmatmul.mubr.bf16.gmra.mxu0 %v1452
    %v1488 = vpop.f32.mrf.mxu0
    %v1489 = vadd.f32 0.0, %v1488
    %v1490 = vpop.f32.mrf.mxu0
    %v1491 = vpop.f32.mrf.mxu0
    %v1492 = vadd.f32 0.0, %v1491
    %v1493 = vpop.f32.mrf.mxu0
    %1494 = vdwg.mxu0
    %v1495 = vsel %vm88, %v1321, 0.0
    %v1496 = vsel %vm88, %v1377, 0.0
    %v1497 = vadd.f32 %v1495, %v1496
    %v1498 = vsel %vm88, %v1433, 0.0
    %v1499 = vadd.f32 %v1497, %v1498
    %v1500 = vsel %vm88, %v1489, 0.0
    %v1501 = vadd.f32 %v1499, %v1500
    %v1502 = vsel %vm88, %v1324, 0.0
    %v1503 = vsel %vm88, %v1380, 0.0
    %v1504 = vadd.f32 %v1502, %v1503
    %v1505 = vsel %vm88, %v1436, 0.0
    %v1506 = vadd.f32 %v1504, %v1505
    %v1507 = vsel %vm88, %v1492, 0.0
    %v1508 = vadd.f32 %v1506, %v1507
    %1509 = vst.msk [vmem:[#allocation8] sm:$0xff] %vm88, %v1501
    %1510 = vst.msk [vmem:[#allocation8 + $0x8] sm:$0xff] %vm88, %v1508
    // Predicated region
    $region26: #{tpu_custom_call.1} parent=1 // pred_check
      _
    $region27: #{tpu_custom_call.1} parent=1 // pred_check_branch
      %1512 = sbr.rel (0) target = $region29
    $region28: #{tpu_custom_call.1} parent=1 // pred_region
      %s1514 = ssub.s32 256, 256
      %1515 = vsyncadd [#allocation4], %s1514
      %s1516 = sshll.u32 [#allocation8], 4
      %s1517 = int_to_ptr.vmem [resolvable:$true] %s1516
      %1522 = dma.vmem_to_hbm [thread:$0]  %s1517, 256, %s3, [#allocation4], 128, 128, 8
    $region29: #{tpu_custom_call.1} parent=1 // pred_fallthru
      _
    // Predicated region
    $region30: #{tpu_custom_call.1} parent=1 // pred_check
      _
    $region31: #{tpu_custom_call.1} parent=1 // pred_check_branch
      %1524 = sbr.rel (0) target = $region33
    $region32: #{tpu_custom_call.1} parent=1 // pred_region
      %1525 = dma.done [#allocation4], 256
    $region33: #{tpu_custom_call.1} parent=1 // pred_fallthru
      _
    %1526 = vsyncpa [#allocation3], 1
    %1527 = vsyncpa [#allocation6], 1
    %1528 = vsyncpa [#allocation4], 1

</llo_original>
